<compile_context>
chip_gen: v7x
topology: tpu7x:2x2x1
jax: 0.10.0
libtpu: 0.0.40
codegen_flags: <defaults>
</compile_context>

<pallas_src>
import functools

import numpy as np
import jax
import jax.numpy as jnp
from jax import lax
from jax.experimental import pallas as pl
from jax.experimental.pallas import tpu as pltpu


def build_fold_matrix(output_size, kernel_size, stride, padding):
    """Dense 0/1 col2im scatter matrix M[(k*L + l), (h*W + w)] (torch.nn.Fold)."""
    H, W = output_size
    kh, kw = kernel_size
    sh, sw = stride
    ph, pw = padding
    n_h = (H + 2 * ph - kh) // sh + 1
    n_w = (W + 2 * pw - kw) // sw + 1
    L = n_h * n_w
    m = np.zeros((kh * kw * L, H * W), dtype=np.float32)
    for lh in range(n_h):
        for lw in range(n_w):
            l = lh * n_w + lw
            for i in range(kh):
                for j in range(kw):
                    h = lh * sh - ph + i
                    w = lw * sw - pw + j
                    if 0 <= h < H and 0 <= w < W:
                        m[(i * kw + j) * L + l, h * W + w] = 1.0
    return jnp.asarray(m), L


def _soft_comp_kernel(x_ref, w_ref, bemb_ref, fold_ref, bias_ref, o_ref,
                      emb_ref, *, F, c_pad, K, L):
    """Fused embedding Linear + Fold(col2im) + bias for one (frame-block, col-tile)."""
    col = pl.program_id(1)

    # ---- embedding for the whole frame block, built once (col == 0) ----
    # Target layout puts both k and l in the contraction (lane) dim:
    #   emb[f*c_pad + c, k*L + l] = sum_h W[c*K+k, h] * x[f, l, h] + b[c*K+k]
    # Weights are pre-permuted k-major / channel-padded host side, so each
    # per-frame dot_general gives a 128-row (K*c_pad, L) result whose K
    # contiguous (c_pad, L) slabs are regrouped into lanes with one concat
    # and stored with a single aligned full-width store per frame.
    @pl.when(col == 0)
    def _():
        for f in range(F):                       # static unroll, F is small
            e = lax.dot_general(
                w_ref[...], x_ref[f],
                (((1,), (1,)), ((), ())),
                preferred_element_type=jnp.float32) + bemb_ref[...]
            row = jnp.concatenate(
                [e[k * c_pad:(k + 1) * c_pad, :] for k in range(K)], axis=1)
            emb_ref[pl.ds(f * c_pad, c_pad), :] = row   # (c_pad, K*L), f32

    # ---- Fold as ONE MXU matmul with a K*L-deep contraction (bf16 x bf16) ----
    acc = jnp.dot(emb_ref[...].astype(jnp.bfloat16), fold_ref[...],
                  preferred_element_type=jnp.float32)    # (F*c_pad, tn) f32
    # output-bias add + full-sublane, lane-dense store (padded channel rows).
    o_ref[...] = (acc + bias_ref[...]).astype(o_ref.dtype)


def _vmem_capacity_bytes():
    try:
        return int(pltpu.get_tpu_info().vmem_capacity_bytes)
    except Exception:
        return 64 * 2 ** 20          # conservative fallback: v7x-sized VMEM


def _pick_frame_batch(bt, c_pad, target_rows=256):
    """Largest F dividing bt with F*c_pad <= target_rows, preferring to keep
    the parallel frame-grid extent >= 2 (megacore / two v7x TensorCores)."""
    f_cap = max(1, target_rows // c_pad)
    divisors = [f for f in range(1, min(f_cap, bt) + 1) if bt % f == 0]
    multi_block = [f for f in divisors if bt // f >= 2]
    return max(multi_block) if multi_block else max(divisors)


def _pick_col_tile(hw, rows, fold_rows, vmem_cap):
    """Column tile over H*W: full extent if it fits, else a 128-multiple."""
    # per-generation cap: ~512 on v7x (64 MiB VMEM), up to 2048 on v5e/v6e.
    max_tile = 512 if vmem_cap <= 64 * 2 ** 20 else 2048
    # keep the double-buffered bf16 fold block within ~1/8 of VMEM and the
    # f32 matmul result tile within ~2 MiB of VMEM temporaries.
    max_tile = min(max_tile,
                   (vmem_cap // 8) // (2 * fold_rows * 2),
                   (2 * 2 ** 20) // (4 * rows))
    max_tile = max(128, (max_tile // 128) * 128)
    if hw <= max_tile:
        return hw
    for tn in range(max_tile, 127, -128):
        if hw % tn == 0:
            return tn
    # ragged last tile: out-of-bounds columns are masked on store and the
    # fold matmul is column-wise independent, so this stays correct.
    return max_tile


def soft_comp_forward(x, t, w_lin, b_lin, bias, fold_mat, channel, output_size,
                      kernel_size):
    """x: (b, n, hidden); w_lin: (c_out, hidden) torch nn.Linear layout;
    b_lin: (c_out,); bias: (channel, H, W); fold_mat: (K*L, H*W) float."""
    b, n, hidden = x.shape
    H, W = output_size
    K = kernel_size[0] * kernel_size[1]
    c_out = K * channel
    assert w_lin.shape == (c_out, hidden)
    L = n // t
    assert n == t * L and fold_mat.shape == (K * L, H * W)
    bt = b * t
    hw = H * W

    # ---- host-side parameter repack: k-major rows, channel padded to 8 ----
    c_pad = ((channel + 7) // 8) * 8
    w3 = jnp.transpose(w_lin.reshape(channel, K, hidden), (1, 0, 2))  # (K, C, h)
    w_perm = jnp.pad(w3, ((0, 0), (0, c_pad - channel), (0, 0)))
    w_perm = w_perm.reshape(K * c_pad, hidden)
    b3 = b_lin.reshape(channel, K).T                                   # (K, C)
    b_perm = jnp.pad(b3, ((0, 0), (0, c_pad - channel))).reshape(K * c_pad, 1)

    vmem_cap = _vmem_capacity_bytes()
    F = _pick_frame_batch(bt, c_pad)
    n_fb = bt // F
    rows = F * c_pad

    tn = _pick_col_tile(hw, rows, K * L, vmem_cap)
    n_col = pl.cdiv(hw, tn)

    x_frames = x.reshape(bt, L, hidden)
    fold_bf16 = fold_mat.astype(jnp.bfloat16)          # exact for 0/1 entries
    bias_pad = jnp.pad(bias.reshape(channel, hw),
                       ((0, c_pad - channel), (0, 0)))
    bias_tiled = jnp.tile(bias_pad, (F, 1))            # (F*c_pad, hw), f32

    # VMEM footprint with every pipeline double buffer + the scratch counted.
    footprint = (2 * F * L * hidden * 4          # x frame block
                 + 2 * K * c_pad * hidden * 4    # linear weight
                 + 2 * K * c_pad * 4             # linear bias
                 + 2 * K * L * tn * 2            # fold matrix (bf16)
                 + 2 * rows * tn * 4             # output bias
                 + 2 * rows * tn * 4             # output block
                 + rows * K * L * 4)             # embedding scratch (f32)
    vmem_limit = int(min(max(2 * footprint, 16 * 2 ** 20),
                         int(0.75 * vmem_cap)))

    kernel = functools.partial(_soft_comp_kernel, F=F, c_pad=c_pad, K=K, L=L)

    out = pl.pallas_call(
        kernel,
        grid=(n_fb, n_col),
        out_shape=jax.ShapeDtypeStruct((bt * c_pad, hw), jnp.float32),
        in_specs=[
            pl.BlockSpec((F, L, hidden), lambda fb, c: (fb, 0, 0)),    # frames
            pl.BlockSpec((K * c_pad, hidden), lambda fb, c: (0, 0)),   # weight
            pl.BlockSpec((K * c_pad, 1), lambda fb, c: (0, 0)),        # lin bias
            pl.BlockSpec((K * L, tn), lambda fb, c: (0, c)),           # fold mat
            pl.BlockSpec((rows, tn), lambda fb, c: (0, c)),            # out bias
        ],
        out_specs=pl.BlockSpec((rows, tn), lambda fb, c: (fb, c)),
        scratch_shapes=[pltpu.VMEM((rows, K * L), jnp.float32)],
        compiler_params=pltpu.CompilerParams(
            dimension_semantics=("parallel", "arbitrary"),
            vmem_limit_bytes=vmem_limit),
    )(x_frames, w_perm, b_perm, fold_bf16, bias_tiled)

    # drop the padded channel rows in the XLA wrapper (keeps kernel stores
    # full-sublane / lane-dense).
    return out.reshape(bt, c_pad, H, W)[:, :channel]


if __name__ == "__main__":
    # Module hyperparameters (small, consistent with the forward's constraints)
    channel = 4
    hidden = 32
    output_size = (16, 16)
    kernel_size = (4, 4)
    stride = (2, 2)
    padding = (1, 1)
    K = kernel_size[0] * kernel_size[1]
    c_out = K * channel  # 64

    fold_mat, L = build_fold_matrix(output_size, kernel_size, stride, padding)

    b = 2
    t = 2
    n = t * L  # n must be t * (#sliding positions) for Fold to be valid

    key = jax.random.PRNGKey(0)
    k1, k2, k3, k4 = jax.random.split(key, 4)
    x = jax.random.normal(k1, (b, n, hidden), dtype=jnp.float32)
    # nn.Linear(hidden, c_out) weight in torch layout (out_features, in_features)
    w_lin = jax.random.normal(k2, (c_out, hidden), dtype=jnp.float32) * 0.05
    b_lin = jax.random.normal(k3, (c_out,), dtype=jnp.float32) * 0.05
    # self.bias parameter (zeros in __init__; random here to exercise the add)
    bias = jax.random.normal(k4, (channel,) + output_size, dtype=jnp.float32) * 0.05

    out = soft_comp_forward(x, t, w_lin, b_lin, bias, fold_mat, channel,
                            output_size, kernel_size)
    out = jax.block_until_ready(out)

    # pure-JAX reference mirroring the torch module (torch weight layout)
    H, W = output_size
    feat_ref = x.reshape(b * n, hidden) @ w_lin.T + b_lin
    feat_ref = feat_ref.reshape(b * t, L, c_out).transpose(0, 2, 1)
    feat_ref = feat_ref.reshape(b * t, channel, K * L)
    ref = (feat_ref @ fold_mat + bias.reshape(channel, -1)).reshape(
        b * t, channel, H, W)

    assert out.shape == (b * t, channel, H, W)
    # The fold matmul uses bf16 operands (fold matrix is exact 0/1 in bf16;
    # the embedding operand is rounded to bf16), so tolerance is loosened.
    np.testing.assert_allclose(np.asarray(out), np.asarray(ref),
                               rtol=2e-2, atol=2e-2)
    print("KERNEL_OK")
</pallas_src>

<mosaic_0001>
module attributes {stable_mosaic.version = 11 : i64} {
  func.func @_soft_comp_kernel(%arg0: i32, %arg1: i32, %arg2: memref<2x64x32xf32, #tpu.memory_space<vmem>>, %arg3: memref<128x32xf32, #tpu.memory_space<vmem>>, %arg4: memref<128x1xf32, #tpu.memory_space<vmem>>, %arg5: memref<1024x256xbf16, #tpu.memory_space<vmem>>, %arg6: memref<16x256xf32, #tpu.memory_space<vmem>>, %arg7: memref<16x256xf32, #tpu.memory_space<vmem>>, %arg8: memref<16x1024xf32, #tpu.memory_space<vmem>>) attributes {dimension_semantics = [#tpu.dimension_semantics<parallel>, #tpu.dimension_semantics<arbitrary>], iteration_bounds = array<i64: 2, 1>, scalar_prefetch = 0 : i64, scratch_operands = 1 : i64, tpu.core_type = #tpu.core_type<tc>, window_params = [{transform_indices = @transform_0, window_bounds = array<i64: 2, 64, 32>}, {pipeline_mode = #tpu.pipeline_mode<synchronous>, transform_indices = @transform_1, window_bounds = array<i64: 128, 32>}, {pipeline_mode = #tpu.pipeline_mode<synchronous>, transform_indices = @transform_2, window_bounds = array<i64: 128, 1>}, {transform_indices = @transform_3, window_bounds = array<i64: 1024, 256>}, {transform_indices = @transform_4, window_bounds = array<i64: 16, 256>}, {transform_indices = @transform_5, window_bounds = array<i64: 16, 256>}]} {
    %c0_i32 = arith.constant 0 : i32
    %0 = arith.cmpi eq, %arg1, %c0_i32 : i32
    %1 = arith.extui %0 : i1 to i32
    %c0_i32_0 = arith.constant 0 : i32
    %2 = arith.cmpi ne, %1, %c0_i32_0 : i32
    scf.if %2 {
      %c0_8 = arith.constant 0 : index
      %c0_9 = arith.constant 0 : index
      %10 = vector.load %arg3[%c0_8, %c0_9] : memref<128x32xf32, #tpu.memory_space<vmem>>, vector<128x32xf32>
      %c0_10 = arith.constant 0 : index
      %c0_11 = arith.constant 0 : index
      %c0_12 = arith.constant 0 : index
      %11 = vector.load %arg2[%c0_10, %c0_11, %c0_12] : memref<2x64x32xf32, #tpu.memory_space<vmem>>, vector<1x64x32xf32>
      %12 = vector.shape_cast %11 : vector<1x64x32xf32> to vector<64x32xf32>
      %cst_13 = arith.constant dense<0.000000e+00> : vector<128x64xf32>
      %13 = tpu.matmul %10, %12, %cst_13 {dimension_numbers = #tpu.dot_dimension_numbers<[1], [1], [0], [0], [0, 0, 1, 0], [], []>} : vector<128x32xf32>, vector<64x32xf32>, vector<128x64xf32> -> vector<128x64xf32>
      %c0_14 = arith.constant 0 : index
      %c0_15 = arith.constant 0 : index
      %14 = vector.load %arg4[%c0_14, %c0_15] : memref<128x1xf32, #tpu.memory_space<vmem>>, vector<128x1xf32>
      %15 = vector.broadcast %14 : vector<128x1xf32> to vector<128x64xf32>
      %16 = arith.addf %13, %15 : vector<128x64xf32>
      %17 = vector.extract_strided_slice %16 {offsets = [0, 0], sizes = [8, 64], strides = [1, 1]} : vector<128x64xf32> to vector<8x64xf32>
      %18 = vector.extract_strided_slice %16 {offsets = [8, 0], sizes = [8, 64], strides = [1, 1]} : vector<128x64xf32> to vector<8x64xf32>
      %19 = vector.extract_strided_slice %16 {offsets = [16, 0], sizes = [8, 64], strides = [1, 1]} : vector<128x64xf32> to vector<8x64xf32>
      %20 = vector.extract_strided_slice %16 {offsets = [24, 0], sizes = [8, 64], strides = [1, 1]} : vector<128x64xf32> to vector<8x64xf32>
      %21 = vector.extract_strided_slice %16 {offsets = [32, 0], sizes = [8, 64], strides = [1, 1]} : vector<128x64xf32> to vector<8x64xf32>
      %22 = vector.extract_strided_slice %16 {offsets = [40, 0], sizes = [8, 64], strides = [1, 1]} : vector<128x64xf32> to vector<8x64xf32>
      %23 = vector.extract_strided_slice %16 {offsets = [48, 0], sizes = [8, 64], strides = [1, 1]} : vector<128x64xf32> to vector<8x64xf32>
      %24 = vector.extract_strided_slice %16 {offsets = [56, 0], sizes = [8, 64], strides = [1, 1]} : vector<128x64xf32> to vector<8x64xf32>
      %25 = vector.extract_strided_slice %16 {offsets = [64, 0], sizes = [8, 64], strides = [1, 1]} : vector<128x64xf32> to vector<8x64xf32>
      %26 = vector.extract_strided_slice %16 {offsets = [72, 0], sizes = [8, 64], strides = [1, 1]} : vector<128x64xf32> to vector<8x64xf32>
      %27 = vector.extract_strided_slice %16 {offsets = [80, 0], sizes = [8, 64], strides = [1, 1]} : vector<128x64xf32> to vector<8x64xf32>
      %28 = vector.extract_strided_slice %16 {offsets = [88, 0], sizes = [8, 64], strides = [1, 1]} : vector<128x64xf32> to vector<8x64xf32>
      %29 = vector.extract_strided_slice %16 {offsets = [96, 0], sizes = [8, 64], strides = [1, 1]} : vector<128x64xf32> to vector<8x64xf32>
      %30 = vector.extract_strided_slice %16 {offsets = [104, 0], sizes = [8, 64], strides = [1, 1]} : vector<128x64xf32> to vector<8x64xf32>
      %31 = vector.extract_strided_slice %16 {offsets = [112, 0], sizes = [8, 64], strides = [1, 1]} : vector<128x64xf32> to vector<8x64xf32>
      %32 = vector.extract_strided_slice %16 {offsets = [120, 0], sizes = [8, 64], strides = [1, 1]} : vector<128x64xf32> to vector<8x64xf32>
      %33 = tpu.concatenate %17, %18, %19, %20, %21, %22, %23, %24, %25, %26, %27, %28, %29, %30, %31, %32 in 1 : vector<8x64xf32>, vector<8x64xf32>, vector<8x64xf32>, vector<8x64xf32>, vector<8x64xf32>, vector<8x64xf32>, vector<8x64xf32>, vector<8x64xf32>, vector<8x64xf32>, vector<8x64xf32>, vector<8x64xf32>, vector<8x64xf32>, vector<8x64xf32>, vector<8x64xf32>, vector<8x64xf32>, vector<8x64xf32> -> vector<8x1024xf32>
      %c0_16 = arith.constant 0 : index
      %c0_17 = arith.constant 0 : index
      %34 = vector.load %arg8[%c0_16, %c0_17] : memref<16x1024xf32, #tpu.memory_space<vmem>>, vector<8x1024xf32>
      tpu.vector_store %arg8[%c0_16, %c0_17], %33 {strides = array<i32>} : memref<16x1024xf32, #tpu.memory_space<vmem>>, vector<8x1024xf32>,
      %c0_18 = arith.constant 0 : index
      %c0_19 = arith.constant 0 : index
      %35 = vector.load %arg3[%c0_18, %c0_19] : memref<128x32xf32, #tpu.memory_space<vmem>>, vector<128x32xf32>
      %c1 = arith.constant 1 : index
      %c0_20 = arith.constant 0 : index
      %c0_21 = arith.constant 0 : index
      %36 = vector.load %arg2[%c1, %c0_20, %c0_21] : memref<2x64x32xf32, #tpu.memory_space<vmem>>, vector<1x64x32xf32>
      %37 = vector.shape_cast %36 : vector<1x64x32xf32> to vector<64x32xf32>
      %cst_22 = arith.constant dense<0.000000e+00> : vector<128x64xf32>
      %38 = tpu.matmul %35, %37, %cst_22 {dimension_numbers = #tpu.dot_dimension_numbers<[1], [1], [0], [0], [0, 0, 1, 0], [], []>} : vector<128x32xf32>, vector<64x32xf32>, vector<128x64xf32> -> vector<128x64xf32>
      %c0_23 = arith.constant 0 : index
      %c0_24 = arith.constant 0 : index
      %39 = vector.load %arg4[%c0_23, %c0_24] : memref<128x1xf32, #tpu.memory_space<vmem>>, vector<128x1xf32>
      %40 = vector.broadcast %39 : vector<128x1xf32> to vector<128x64xf32>
      %41 = arith.addf %38, %40 : vector<128x64xf32>
      %42 = vector.extract_strided_slice %41 {offsets = [0, 0], sizes = [8, 64], strides = [1, 1]} : vector<128x64xf32> to vector<8x64xf32>
      %43 = vector.extract_strided_slice %41 {offsets = [8, 0], sizes = [8, 64], strides = [1, 1]} : vector<128x64xf32> to vector<8x64xf32>
      %44 = vector.extract_strided_slice %41 {offsets = [16, 0], sizes = [8, 64], strides = [1, 1]} : vector<128x64xf32> to vector<8x64xf32>
      %45 = vector.extract_strided_slice %41 {offsets = [24, 0], sizes = [8, 64], strides = [1, 1]} : vector<128x64xf32> to vector<8x64xf32>
      %46 = vector.extract_strided_slice %41 {offsets = [32, 0], sizes = [8, 64], strides = [1, 1]} : vector<128x64xf32> to vector<8x64xf32>
      %47 = vector.extract_strided_slice %41 {offsets = [40, 0], sizes = [8, 64], strides = [1, 1]} : vector<128x64xf32> to vector<8x64xf32>
      %48 = vector.extract_strided_slice %41 {offsets = [48, 0], sizes = [8, 64], strides = [1, 1]} : vector<128x64xf32> to vector<8x64xf32>
      %49 = vector.extract_strided_slice %41 {offsets = [56, 0], sizes = [8, 64], strides = [1, 1]} : vector<128x64xf32> to vector<8x64xf32>
      %50 = vector.extract_strided_slice %41 {offsets = [64, 0], sizes = [8, 64], strides = [1, 1]} : vector<128x64xf32> to vector<8x64xf32>
      %51 = vector.extract_strided_slice %41 {offsets = [72, 0], sizes = [8, 64], strides = [1, 1]} : vector<128x64xf32> to vector<8x64xf32>
      %52 = vector.extract_strided_slice %41 {offsets = [80, 0], sizes = [8, 64], strides = [1, 1]} : vector<128x64xf32> to vector<8x64xf32>
      %53 = vector.extract_strided_slice %41 {offsets = [88, 0], sizes = [8, 64], strides = [1, 1]} : vector<128x64xf32> to vector<8x64xf32>
      %54 = vector.extract_strided_slice %41 {offsets = [96, 0], sizes = [8, 64], strides = [1, 1]} : vector<128x64xf32> to vector<8x64xf32>
      %55 = vector.extract_strided_slice %41 {offsets = [104, 0], sizes = [8, 64], strides = [1, 1]} : vector<128x64xf32> to vector<8x64xf32>
      %56 = vector.extract_strided_slice %41 {offsets = [112, 0], sizes = [8, 64], strides = [1, 1]} : vector<128x64xf32> to vector<8x64xf32>
      %57 = vector.extract_strided_slice %41 {offsets = [120, 0], sizes = [8, 64], strides = [1, 1]} : vector<128x64xf32> to vector<8x64xf32>
      %58 = tpu.concatenate %42, %43, %44, %45, %46, %47, %48, %49, %50, %51, %52, %53, %54, %55, %56, %57 in 1 : vector<8x64xf32>, vector<8x64xf32>, vector<8x64xf32>, vector<8x64xf32>, vector<8x64xf32>, vector<8x64xf32>, vector<8x64xf32>, vector<8x64xf32>, vector<8x64xf32>, vector<8x64xf32>, vector<8x64xf32>, vector<8x64xf32>, vector<8x64xf32>, vector<8x64xf32>, vector<8x64xf32>, vector<8x64xf32> -> vector<8x1024xf32>
      %c8 = arith.constant 8 : index
      %c0_25 = arith.constant 0 : index
      %59 = vector.load %arg8[%c8, %c0_25] : memref<16x1024xf32, #tpu.memory_space<vmem>>, vector<8x1024xf32>
      tpu.vector_store %arg8[%c8, %c0_25], %58 {strides = array<i32>} : memref<16x1024xf32, #tpu.memory_space<vmem>>, vector<8x1024xf32>,
    } else {
    }
    %c0 = arith.constant 0 : index
    %c0_1 = arith.constant 0 : index
    %3 = vector.load %arg8[%c0, %c0_1] : memref<16x1024xf32, #tpu.memory_space<vmem>>, vector<16x1024xf32>
    %4 = arith.truncf %3 : vector<16x1024xf32> to vector<16x1024xbf16>
    %c0_2 = arith.constant 0 : index
    %c0_3 = arith.constant 0 : index
    %5 = vector.load %arg5[%c0_2, %c0_3] : memref<1024x256xbf16, #tpu.memory_space<vmem>>, vector<1024x256xbf16>
    %cst = arith.constant dense<0.000000e+00> : vector<16x256xf32>
    %6 = tpu.matmul %4, %5, %cst {dimension_numbers = #tpu.dot_dimension_numbers<[1], [0], [0], [1], [0, 0, 1, 1], [], []>} : vector<16x1024xbf16>, vector<1024x256xbf16>, vector<16x256xf32> -> vector<16x256xf32>
    %c0_4 = arith.constant 0 : index
    %c0_5 = arith.constant 0 : index
    %7 = vector.load %arg6[%c0_4, %c0_5] : memref<16x256xf32, #tpu.memory_space<vmem>>, vector<16x256xf32>
    %8 = arith.addf %6, %7 : vector<16x256xf32>
    %c0_6 = arith.constant 0 : index
    %c0_7 = arith.constant 0 : index
    %9 = vector.load %arg7[%c0_6, %c0_7] : memref<16x256xf32, #tpu.memory_space<vmem>>, vector<16x256xf32>
    tpu.vector_store %arg7[%c0_6, %c0_7], %8 {strides = array<i32>} : memref<16x256xf32, #tpu.memory_space<vmem>>, vector<16x256xf32>,
    return
  }
  func.func @transform_0(%arg0: i32, %arg1: i32) -> (i32, i32, i32) {
    %c0_i32 = arith.constant 0 : i32
    %c0_i32_0 = arith.constant 0 : i32
    %c0_i32_1 = arith.constant 0 : i32
    return %arg0, %c0_i32, %c0_i32_0 : i32, i32, i32
  }
  func.func @transform_1(%arg0: i32, %arg1: i32) -> (i32, i32) {
    %c0_i32 = arith.constant 0 : i32
    %c0_i32_0 = arith.constant 0 : i32
    %c0_i32_1 = arith.constant 0 : i32
    return %c0_i32, %c0_i32_0 : i32, i32
  }
  func.func @transform_2(%arg0: i32, %arg1: i32) -> (i32, i32) {
    %c0_i32 = arith.constant 0 : i32
    %c0_i32_0 = arith.constant 0 : i32
    %c0_i32_1 = arith.constant 0 : i32
    return %c0_i32, %c0_i32_0 : i32, i32
  }
  func.func @transform_3(%arg0: i32, %arg1: i32) -> (i32, i32) {
    %c0_i32 = arith.constant 0 : i32
    %c0_i32_0 = arith.constant 0 : i32
    return %c0_i32, %arg1 : i32, i32
  }
  func.func @transform_4(%arg0: i32, %arg1: i32) -> (i32, i32) {
    %c0_i32 = arith.constant 0 : i32
    %c0_i32_0 = arith.constant 0 : i32
    return %c0_i32, %arg1 : i32, i32
  }
  func.func @transform_5(%arg0: i32, %arg1: i32) -> (i32, i32) {
    %c0_i32 = arith.constant 0 : i32
    return %arg0, %arg1 : i32, i32
  }
}

</mosaic_0001>

<llo_original>
// kernel: tpu_custom_call.1
$region0: #{tpu_custom_call.1}
  #allocation0 [shape = 'u32[]', space=smem, size = 0x4, offset = 0x4, fixed_abs, tag = 'smem constant byte address 0x4 - core index']
  #allocation1 [shape = 'u32[144,128]{1,0:T(1,128)}', space=vmem, size = 0x12000, scoped, tag = 'internal scratch']
  #allocation2 [shape = 'f32[16,1024]{1,0:T(8,128)}', space=vmem, size = 0x10000, scoped, tag = 'scratch operand']
  %s0 = inlined_call_operand.vmem [shape: f32[4,64,32], index: 0, kind: input, shape index: {}]
  %s1 = inlined_call_operand.vmem [shape: f32[128,32], index: 1, kind: input, shape index: {}]
  %s2 = inlined_call_operand.vmem [shape: f32[128,1], index: 2, kind: input, shape index: {}]
  %s3 = inlined_call_operand.hbm [shape: bf16[1024,256], index: 3, kind: input, shape index: {}]
  %s4 = inlined_call_operand.vmem [shape: f32[16,256], index: 4, kind: input, shape index: {}]
  %s5 = inlined_call_operand.hbm [shape: f32[32,256], index: 5, kind: output, shape index: {}]
  %s6 = sld [smem:[#allocation0]]
  $region61: #{tpu_custom_call.1} parent=0
    _
  %s8 = ssub.s32 1, %s6
  %s9 = scalar_select 0, %s8, %s6
  $region1: #{tpu_custom_call.1} parent=0
    #allocation3 [shape = 'u8[524288]{0}', space=vmem, size = 0x80000, scoped, tag = 'input window, operand 3, single buffered']
    #allocation4 [shape = 's32[2]{0}', space=sflag, size = 0x8, scoped, tag = 'scoped memory for tpu_custom_call.1']
    #allocation5 [shape = 's32[2]{0}', space=sflag, size = 0x8, scoped, tag = 'scoped memory for tpu_custom_call.1']
    #allocation6 [shape = 'u8[32768]{0}', space=vmem, size = 0x8000, scoped, tag = 'output window, operand 0']
    %10 = vsyncpa [#allocation4], 0
    %11 = vsyncpa [#allocation5], 0
    %s12 = scalar_lea.sflag [#allocation5], 1
    %13 = vsyncpa %s12, 0
    loop: start=0, step=1, limit=4
    $region2: #{tpu_custom_call.1} parent=1 // loop_pre_header
      _
    $region3: #{tpu_custom_call.1} parent=1 // loop_header
      %s15 = sphi 0, %s19
      %p16 = scmp.ge.s32.totalorder %s15, 4
      %s22 = sphi 0, %s34
      %s23 = sphi 0, %s30
      %s24 = sphi 0, %s22
      %s25 = sphi 0, %s23
      %s26 = sphi 0, %s24
      %s27 = sphi 0, %s25
      %s37 = sphi 0, %s39
      %s40 = sphi 0, %s37
      %s41 = sphi 0, %s40
      %s57 = sphi 0, %s41
      %s61 = sphi 0, %s61
      %s63 = sphi 0, %s61
      %s64 = sphi 0, %s63
      %s78 = sphi 0, %s64
      %s82 = sphi 0, %s82
      %s84 = sphi 0, %s82
      %s85 = sphi 0, %s84
      %s99 = sphi 0, %s85
      %s105 = sphi 0, %s107
      %s108 = sphi 0, %s105
      %s109 = sphi 0, %s108
      %s125 = sphi 0, %s109
      %s131 = sphi 0, %s133
      %s134 = sphi 0, %s131
      %s135 = sphi 0, %s134
      %s151 = sphi 0, %s135
      %s159 = sphi 0, %s161
      %s162 = sphi 0, %s159
      %s163 = sphi 0, %s162
      %s179 = sphi 0, %s163
    $region4: #{tpu_custom_call.1} parent=1 // loop_header_branch
      %18 = sbr.rel (%p16) target = $region8
    $region5: #{tpu_custom_call.1} parent=1 // loop_body
      %s20 = ssub.s32 %s15, 1
      %s21 = ssub.s32 %s15, 2
      %s28 = sadd.s32 1, %s23
      %p29 = scmp.ge.s32.totalorder %s28, 1
      %s30 = scalar_select %p29, 0, %s28
      %s31 = sadd.s32 1, %s22
      %s32 = scalar_select %p29, %s31, %s22
      %p33 = scmp.ge.s32.totalorder %s32, 2
      %s34 = scalar_select %p33, 0, %s32
      %s35 = ssub.s32 %s22, %s34
      %p36 = scmp.eq.s32.totalorder %s35, 0
      %s38 = sadd.s32 %s37, 1
      %s39 = scalar_select %p36, %s37, %s38
      %p42 = pneg %p36
      %p43 = scmp.eq.s32.totalorder %s15, 1
      %p44 = por %p42, %p43
      %p45 = scmp.ne.s32.totalorder %s37, %s40
      %p46 = scmp.eq.s32.totalorder %s15, 0
      %p47 = por %p45, %p46
      %p48 = scmp.ne.s32.totalorder %s37, %s40
      %p49 = scmp.eq.s32.totalorder %s20, 1
      %p50 = por %p48, %p49
      %p51 = scmp.ne.s32.totalorder %s40, %s41
      %p52 = scmp.eq.s32.totalorder %s20, 0
      %p53 = por %p51, %p52
      %p54 = scmp.ne.s32.totalorder %s40, %s41
      %p55 = scmp.eq.s32.totalorder %s21, 1
      %p56 = por %p54, %p55
      %p58 = scmp.ne.s32.totalorder %s41, %s57
      %p59 = scmp.eq.s32.totalorder %s21, 0
      %p60 = por %p58, %p59
      %s62 = sadd.s32 %s61, 1
      %p65 = scmp.eq.s32.totalorder %s15, 1
      %p66 = scmp.ne.s32.totalorder %s61, %s63
      %p67 = scmp.eq.s32.totalorder %s15, 0
      %p68 = por %p66, %p67
      %p69 = scmp.ne.s32.totalorder %s61, %s63
      %p70 = scmp.eq.s32.totalorder %s20, 1
      %p71 = por %p69, %p70
      %p72 = scmp.ne.s32.totalorder %s63, %s64
      %p73 = scmp.eq.s32.totalorder %s20, 0
      %p74 = por %p72, %p73
      %p75 = scmp.ne.s32.totalorder %s63, %s64
      %p76 = scmp.eq.s32.totalorder %s21, 1
      %p77 = por %p75, %p76
      %p79 = scmp.ne.s32.totalorder %s64, %s78
      %p80 = scmp.eq.s32.totalorder %s21, 0
      %p81 = por %p79, %p80
      %s83 = sadd.s32 %s82, 1
      %p86 = scmp.eq.s32.totalorder %s15, 1
      %p87 = scmp.ne.s32.totalorder %s82, %s84
      %p88 = scmp.eq.s32.totalorder %s15, 0
      %p89 = por %p87, %p88
      %p90 = scmp.ne.s32.totalorder %s82, %s84
      %p91 = scmp.eq.s32.totalorder %s20, 1
      %p92 = por %p90, %p91
      %p93 = scmp.ne.s32.totalorder %s84, %s85
      %p94 = scmp.eq.s32.totalorder %s20, 0
      %p95 = por %p93, %p94
      %p96 = scmp.ne.s32.totalorder %s84, %s85
      %p97 = scmp.eq.s32.totalorder %s21, 1
      %p98 = por %p96, %p97
      %p100 = scmp.ne.s32.totalorder %s85, %s99
      %p101 = scmp.eq.s32.totalorder %s21, 0
      %p102 = por %p100, %p101
      %s103 = ssub.s32 %s23, %s30
      %p104 = scmp.eq.s32.totalorder %s103, 0
      %s106 = sadd.s32 %s105, 1
      %s107 = scalar_select %p104, %s105, %s106
      %p110 = pneg %p104
      %p111 = scmp.eq.s32.totalorder %s15, 1
      %p112 = por %p110, %p111
      %p113 = scmp.ne.s32.totalorder %s105, %s108
      %p114 = scmp.eq.s32.totalorder %s15, 0
      %p115 = por %p113, %p114
      %p116 = scmp.ne.s32.totalorder %s105, %s108
      %p117 = scmp.eq.s32.totalorder %s20, 1
      %p118 = por %p116, %p117
      %p119 = scmp.ne.s32.totalorder %s108, %s109
      %p120 = scmp.eq.s32.totalorder %s20, 0
      %p121 = por %p119, %p120
      %p122 = scmp.ne.s32.totalorder %s108, %s109
      %p123 = scmp.eq.s32.totalorder %s21, 1
      %p124 = por %p122, %p123
      %p126 = scmp.ne.s32.totalorder %s109, %s125
      %p127 = scmp.eq.s32.totalorder %s21, 0
      %p128 = por %p126, %p127
      %s129 = ssub.s32 %s23, %s30
      %p130 = scmp.eq.s32.totalorder %s129, 0
      %s132 = sadd.s32 %s131, 1
      %s133 = scalar_select %p130, %s131, %s132
      %p136 = pneg %p130
      %p137 = scmp.eq.s32.totalorder %s15, 1
      %p138 = por %p136, %p137
      %p139 = scmp.ne.s32.totalorder %s131, %s134
      %p140 = scmp.eq.s32.totalorder %s15, 0
      %p141 = por %p139, %p140
      %p142 = scmp.ne.s32.totalorder %s131, %s134
      %p143 = scmp.eq.s32.totalorder %s20, 1
      %p144 = por %p142, %p143
      %p145 = scmp.ne.s32.totalorder %s134, %s135
      %p146 = scmp.eq.s32.totalorder %s20, 0
      %p147 = por %p145, %p146
      %p148 = scmp.ne.s32.totalorder %s134, %s135
      %p149 = scmp.eq.s32.totalorder %s21, 1
      %p150 = por %p148, %p149
      %p152 = scmp.ne.s32.totalorder %s135, %s151
      %p153 = scmp.eq.s32.totalorder %s21, 0
      %p154 = por %p152, %p153
      %s155 = ssub.s32 %s22, %s34
      %s156 = ssub.s32 %s23, %s30
      %s157 = sor.u32 %s155, %s156
      %p158 = scmp.eq.s32.totalorder %s157, 0
      %s160 = sadd.s32 %s159, 1
      %s161 = scalar_select %p158, %s159, %s160
      %p164 = pneg %p158
      %p165 = scmp.eq.s32.totalorder %s15, 1
      %p166 = por %p164, %p165
      %p167 = scmp.ne.s32.totalorder %s159, %s162
      %p168 = scmp.eq.s32.totalorder %s15, 0
      %p169 = por %p167, %p168
      %p170 = scmp.ne.s32.totalorder %s159, %s162
      %p171 = scmp.eq.s32.totalorder %s20, 1
      %p172 = por %p170, %p171
      %p173 = scmp.ne.s32.totalorder %s162, %s163
      %p174 = scmp.eq.s32.totalorder %s20, 0
      %p175 = por %p173, %p174
      %p176 = scmp.ne.s32.totalorder %s162, %s163
      %p177 = scmp.eq.s32.totalorder %s21, 1
      %p178 = por %p176, %p177
      %p180 = scmp.ne.s32.totalorder %s163, %s179
      %p181 = scmp.eq.s32.totalorder %s21, 0
      %p182 = por %p180, %p181
      %p183 = scmp.le.s32.totalorder 1, %s15
      %p184 = scmp.lt.s32.totalorder %s15, 3
      %p185 = pnand %p183, %p184
      %p186 = pneg %p185
      // Predicated region
      $region9: #{tpu_custom_call.1} parent=5 // pred_check
        _
      $region10: #{tpu_custom_call.1} parent=5 // pred_check_branch
        %188 = sbr.rel (%p185) target = $region12
      $region11: #{tpu_custom_call.1} parent=5 // pred_region
        %s189 = ssub.s32 %s15, 1
        // Predicated region
        $region13: #{tpu_custom_call.1} parent=11 // pred_check
          %p190 = pneg %p74
        $region14: #{tpu_custom_call.1} parent=11 // pred_check_branch
          %192 = sbr.rel (%p190) target = $region16
        $region15: #{tpu_custom_call.1} parent=11 // pred_region
          _
        $region16: #{tpu_custom_call.1} parent=11 // pred_fallthru
          _
        // Predicated region
        $region17: #{tpu_custom_call.1} parent=11 // pred_check
          %p193 = pneg %p95
        $region18: #{tpu_custom_call.1} parent=11 // pred_check_branch
          %195 = sbr.rel (%p193) target = $region20
        $region19: #{tpu_custom_call.1} parent=11 // pred_region
          _
        $region20: #{tpu_custom_call.1} parent=11 // pred_fallthru
          _
        // Predicated region
        $region21: #{tpu_custom_call.1} parent=11 // pred_check
          %p196 = pneg %p121
        $region22: #{tpu_custom_call.1} parent=11 // pred_check_branch
          %198 = sbr.rel (%p196) target = $region24
        $region23: #{tpu_custom_call.1} parent=11 // pred_region
          %s199 = smul.u32 2, %s25
          %s201 = ssub.s32 16384, 16384
          %202 = vsyncadd [#allocation4], %s201
          %s203 = smul.addr %s199, 64
          %s204 = scalar_lea.hbm %s3, %s203
          %s205 = sshll.u32 [#allocation3], 4
          %s206 = int_to_ptr.vmem [resolvable:$true] %s205
          %211 = dma.hbm_to_vmem [thread:$0]  %s204, 16384, %s206, [#allocation4], 128, 128, 8
        $region24: #{tpu_custom_call.1} parent=11 // pred_fallthru
          _
        // Predicated region
        $region25: #{tpu_custom_call.1} parent=11 // pred_check
          %p212 = pneg %p147
        $region26: #{tpu_custom_call.1} parent=11 // pred_check_branch
          %214 = sbr.rel (%p212) target = $region28
        $region27: #{tpu_custom_call.1} parent=11 // pred_region
          %s215 = smul.u32 2, %s25
          %p216 = scmp.lt.s32.totalorder %s215, 1
          %s217 = scalar_select %p216, %s215, 1
          %s218 = smul.addr %s217, 8
          %s219 = scalar_lea.vmem %s4, %s218
          %s220 = smul.u32 2, %s25
        $region28: #{tpu_custom_call.1} parent=11 // pred_fallthru
          _
      $region12: #{tpu_custom_call.1} parent=5 // pred_fallthru
        _
      %p221 = scmp.lt.s32.totalorder %s15, 2
      // Predicated region
      $region29: #{tpu_custom_call.1} parent=5 // pred_check
        %p222 = pneg %p221
      $region30: #{tpu_custom_call.1} parent=5 // pred_check_branch
        %224 = sbr.rel (%p222) target = $region32
      $region31: #{tpu_custom_call.1} parent=5 // pred_region
        // Predicated region
        $region33: #{tpu_custom_call.1} parent=31 // pred_check
          %p225 = pneg %p47
        $region34: #{tpu_custom_call.1} parent=31 // pred_check_branch
          %227 = sbr.rel (%p225) target = $region36
        $region35: #{tpu_custom_call.1} parent=31 // pred_region
          %s228 = smul.u32 2, %s22
          %p229 = scmp.lt.s32.totalorder %s228, 3
          %s230 = scalar_select %p229, %s228, 3
          %s231 = smul.addr %s230, 8
          %s232 = smul.addr %s231, 8
          %s233 = scalar_lea.vmem %s0, %s232
          %s234 = smul.u32 2, %s22
        $region36: #{tpu_custom_call.1} parent=31 // pred_fallthru
          _
      $region32: #{tpu_custom_call.1} parent=5 // pred_fallthru
        _
      %p235 = scmp.le.s32.totalorder 1, %s15
      %p236 = scmp.lt.s32.totalorder %s15, 3
      %p237 = pnand %p235, %p236
      %p238 = pneg %p237
      // Predicated region
      $region37: #{tpu_custom_call.1} parent=5 // pred_check
        _
      $region38: #{tpu_custom_call.1} parent=5 // pred_check_branch
        %240 = sbr.rel (%p237) target = $region40
      $region39: #{tpu_custom_call.1} parent=5 // pred_region
        %s241 = ssub.s32 %s15, 1
        // Predicated region
        $region41: #{tpu_custom_call.1} parent=39 // pred_check
          %p242 = pneg %p121
        $region42: #{tpu_custom_call.1} parent=39 // pred_check_branch
          %244 = sbr.rel (%p242) target = $region44
        $region43: #{tpu_custom_call.1} parent=39 // pred_region
          %245 = dma.done [#allocation4], 16384
        $region44: #{tpu_custom_call.1} parent=39 // pred_fallthru
          _
        %s246 = smul.u32 2, %s24
        %p247 = scmp.lt.s32.totalorder %s246, 3
        %s248 = scalar_select %p247, %s246, 3
        %s249 = smul.addr %s248, 8
        %s250 = smul.addr %s249, 8
        %s251 = scalar_lea.vmem %s0, %s250
        %p252 = pneg %p53
        %p253 = pneg %p50
        %p254 = pneg %p74
        %p255 = pneg %p71
        %p256 = pneg %p95
        %p257 = pneg %p92
        %p258 = pneg %p121
        %p259 = pneg %p118
        %s260 = smul.u32 2, %s25
        %p261 = scmp.lt.s32.totalorder %s260, 1
        %s262 = scalar_select %p261, %s260, 1
        %s263 = smul.addr %s262, 8
        %s264 = scalar_lea.vmem %s4, %s263
        %p265 = pneg %p147
        %p266 = pneg %p144
        %p267 = pneg %p175
        %p268 = pneg %p172
        %s269 = sand.u32 %s162, 1
        %s270 = scalar_lea.sflag [#allocation5], %s269
        %s271 = sand.u32 %s162, 1
        %s272 = smul.addr %s271, 32
        %s273 = scalar_lea.vmem [#allocation6], %s272
        %s274 = smul.u32 2, %s24
        %p275 = scmp.lt.s32.totalorder %s274, 3
        %s276 = scalar_select %p275, %s274, 3
        %s277 = smul.addr %s276, 8
        %s278 = smul.addr %s277, 8
        %s279 = scalar_lea.vmem %s0, %s278
        %s280 = smul.u32 2, %s24
        %s281 = smul.u32 2, %s25
        %s282 = smul.u32 2, %s25
        %p283 = scmp.lt.s32.totalorder %s282, 1
        %s284 = scalar_select %p283, %s282, 1
        %s285 = smul.addr %s284, 8
        %s286 = scalar_lea.vmem %s4, %s285
        %s287 = smul.u32 2, %s25
        %s288 = smul.u32 2, %s24
        %s289 = smul.u32 2, %s25
        %p290 = scmp.eq.s32.totalorder %s25, 0
        // Predicated region
        $region45: #{tpu_custom_call.1} parent=39 // pred_check
          %p291 = pneg %p290
        $region46: #{tpu_custom_call.1} parent=39 // pred_check_branch
          %293 = sbr.rel (%p291) target = $region48
        $region47: #{tpu_custom_call.1} parent=39 // pred_region
          %v294 = vld [vmem:[%s1] sm:$0xff]
          %v295 = vld [vmem:[%s1 + $0x8] sm:$0xff]
          %v296 = vld [vmem:[%s1 + $0x10] sm:$0xff]
          %v297 = vld [vmem:[%s1 + $0x18] sm:$0xff]
          %v298 = vld [vmem:[%s1 + $0x20] sm:$0xff]
          %v299 = vld [vmem:[%s1 + $0x28] sm:$0xff]
          %v300 = vld [vmem:[%s1 + $0x30] sm:$0xff]
          %v301 = vld [vmem:[%s1 + $0x38] sm:$0xff]
          %v302 = vld [vmem:[%s1 + $0x40] sm:$0xff]
          %v303 = vld [vmem:[%s1 + $0x48] sm:$0xff]
          %v304 = vld [vmem:[%s1 + $0x50] sm:$0xff]
          %v305 = vld [vmem:[%s1 + $0x58] sm:$0xff]
          %v306 = vld [vmem:[%s1 + $0x60] sm:$0xff]
          %v307 = vld [vmem:[%s1 + $0x68] sm:$0xff]
          %v308 = vld [vmem:[%s1 + $0x70] sm:$0xff]
          %v309 = vld [vmem:[%s1 + $0x78] sm:$0xff]
          %v310 = vld [vmem:[%s279] sm:$0xff]
          %v311 = vld [vmem:[%s279 + $0x8] sm:$0xff]
          %v312 = vld [vmem:[%s279 + $0x10] sm:$0xff]
          %v313 = vld [vmem:[%s279 + $0x18] sm:$0xff]
          %v314 = vld [vmem:[%s279 + $0x20] sm:$0xff]
          %v315 = vld [vmem:[%s279 + $0x28] sm:$0xff]
          %v316 = vld [vmem:[%s279 + $0x30] sm:$0xff]
          %v317 = vld [vmem:[%s279 + $0x38] sm:$0xff]
          %v318 = vld [vmem:[%s2] sm:$0xff]
          %v319 = vld [vmem:[%s2 + $0x8] sm:$0xff]
          %v320 = vld [vmem:[%s2 + $0x10] sm:$0xff]
          %v321 = vld [vmem:[%s2 + $0x18] sm:$0xff]
          %v322 = vld [vmem:[%s2 + $0x20] sm:$0xff]
          %v323 = vld [vmem:[%s2 + $0x28] sm:$0xff]
          %v324 = vld [vmem:[%s2 + $0x30] sm:$0xff]
          %v325 = vld [vmem:[%s2 + $0x38] sm:$0xff]
          %v326 = vld [vmem:[%s2 + $0x40] sm:$0xff]
          %v327 = vld [vmem:[%s2 + $0x48] sm:$0xff]
          %v328 = vld [vmem:[%s2 + $0x50] sm:$0xff]
          %v329 = vld [vmem:[%s2 + $0x58] sm:$0xff]
          %v330 = vld [vmem:[%s2 + $0x60] sm:$0xff]
          %v331 = vld [vmem:[%s2 + $0x68] sm:$0xff]
          %v332 = vld [vmem:[%s2 + $0x70] sm:$0xff]
          %v333 = vld [vmem:[%s2 + $0x78] sm:$0xff]
          %335 = vset.pattern.permute.xlu0 0
          %336 = vperm.xlu0 %335, %v318
          %v337 = vpop.permute.xlu0 %336
          %340 = vset.pattern.permute.xlu0 0
          %341 = vperm.xlu0 %340, %v319
          %v342 = vpop.permute.xlu0 %341
          %345 = vset.pattern.permute.xlu0 0
          %346 = vperm.xlu0 %345, %v320
          %v347 = vpop.permute.xlu0 %346
          %350 = vset.pattern.permute.xlu0 0
          %351 = vperm.xlu0 %350, %v321
          %v352 = vpop.permute.xlu0 %351
          %355 = vset.pattern.permute.xlu0 0
          %356 = vperm.xlu0 %355, %v322
          %v357 = vpop.permute.xlu0 %356
          %360 = vset.pattern.permute.xlu0 0
          %361 = vperm.xlu0 %360, %v323
          %v362 = vpop.permute.xlu0 %361
          %365 = vset.pattern.permute.xlu0 0
          %366 = vperm.xlu0 %365, %v324
          %v367 = vpop.permute.xlu0 %366
          %370 = vset.pattern.permute.xlu0 0
          %371 = vperm.xlu0 %370, %v325
          %v372 = vpop.permute.xlu0 %371
          %375 = vset.pattern.permute.xlu0 0
          %376 = vperm.xlu0 %375, %v326
          %v377 = vpop.permute.xlu0 %376
          %380 = vset.pattern.permute.xlu0 0
          %381 = vperm.xlu0 %380, %v327
          %v382 = vpop.permute.xlu0 %381
          %385 = vset.pattern.permute.xlu0 0
          %386 = vperm.xlu0 %385, %v328
          %v387 = vpop.permute.xlu0 %386
          %390 = vset.pattern.permute.xlu0 0
          %391 = vperm.xlu0 %390, %v329
          %v392 = vpop.permute.xlu0 %391
          %395 = vset.pattern.permute.xlu0 0
          %396 = vperm.xlu0 %395, %v330
          %v397 = vpop.permute.xlu0 %396
          %400 = vset.pattern.permute.xlu0 0
          %401 = vperm.xlu0 %400, %v331
          %v402 = vpop.permute.xlu0 %401
          %405 = vset.pattern.permute.xlu0 0
          %406 = vperm.xlu0 %405, %v332
          %v407 = vpop.permute.xlu0 %406
          %410 = vset.pattern.permute.xlu0 0
          %411 = vperm.xlu0 %410, %v333
          %v412 = vpop.permute.xlu0 %411
          %vm414 = vcmask 261120
          %v416 = vsel %vm414, %v294, 0
          %v419 = vsel %vm414, %v295, 0
          %v422 = vsel %vm414, %v296, 0
          %v425 = vsel %vm414, %v297, 0
          %v428 = vsel %vm414, %v298, 0
          %v431 = vsel %vm414, %v299, 0
          %v434 = vsel %vm414, %v300, 0
          %v437 = vsel %vm414, %v301, 0
          %v440 = vsel %vm414, %v302, 0
          %v443 = vsel %vm414, %v303, 0
          %v446 = vsel %vm414, %v304, 0
          %v449 = vsel %vm414, %v305, 0
          %v452 = vsel %vm414, %v306, 0
          %v455 = vsel %vm414, %v307, 0
          %v458 = vsel %vm414, %v308, 0
          %v461 = vsel %vm414, %v309, 0
          %v464 = vsel %vm414, %v310, 0
          %v467 = vsel %vm414, %v311, 0
          %v470 = vsel %vm414, %v312, 0
          %v473 = vsel %vm414, %v313, 0
          %v476 = vsel %vm414, %v314, 0
          %v479 = vsel %vm414, %v315, 0
          %v482 = vsel %vm414, %v316, 0
          %v485 = vsel %vm414, %v317, 0
          %487 = vmatprep.subr.mxu0 0.0
          %488 = vmatpush1.xpose.msra.mxu0 %v464
          %489 = vmatprep.subr.mxu0 0.0
          %490 = vmatpush1.xpose.msra.mxu0 %v467
          %491 = vmatprep.subr.mxu0 0.0
          %492 = vmatpush1.xpose.msra.mxu0 %v470
          %493 = vmatprep.subr.mxu0 0.0
          %494 = vmatpush1.xpose.msra.mxu0 %v473
          %495 = vmatprep.subr.mxu0 0.0
          %496 = vmatpush1.xpose.msra.mxu0 %v476
          %497 = vmatprep.subr.mxu0 0.0
          %498 = vmatpush1.xpose.msra.mxu0 %v479
          %499 = vmatprep.subr.mxu0 0.0
          %500 = vmatpush1.xpose.msra.mxu0 %v482
          %501 = vmatprep.subr.mxu0 0.0
          %502 = vmatpush1.xpose.msra.mxu0 %v485
          %503 = vmatprep.subr.mxu0 0.0
          %504 = vmatpush1.xpose.msra.mxu0 0.0
          %505 = vmatprep.subr.mxu0 0.0
          %506 = vmatpush1.xpose.msra.mxu0 0.0
          %507 = vmatprep.subr.mxu0 0.0
          %508 = vmatpush1.xpose.msra.mxu0 0.0
          %509 = vmatprep.subr.mxu0 0.0
          %510 = vmatpush1.xpose.msra.mxu0 0.0
          %511 = vmatprep.subr.mxu0 0.0
          %512 = vmatpush1.xpose.msra.mxu0 0.0
          %513 = vmatprep.subr.mxu0 0.0
          %514 = vmatpush1.xpose.msra.mxu0 0.0
          %515 = vmatprep.subr.mxu0 0.0
          %516 = vmatpush1.xpose.msra.mxu0 0.0
          %517 = vmatprep.subr.mxu0 0.0
          %518 = vmatpush1.xpose.msra.mxu0 0.0
          %519 = vmatprep.subr.mxu0 0.0
          %520 = vmatpush1.xpose.msra.mxu0 0.0
          %521 = vmatprep.subr.mxu0 0.0
          %522 = vmatpush1.xpose.msra.mxu0 0.0
          %523 = vmatprep.subr.mxu0 0.0
          %524 = vmatpush1.xpose.msra.mxu0 0.0
          %525 = vmatprep.subr.mxu0 0.0
          %526 = vmatpush1.xpose.msra.mxu0 0.0
          %527 = vmatprep.subr.mxu0 0.0
          %528 = vmatpush1.xpose.msra.mxu0 0.0
          %529 = vmatprep.subr.mxu0 0.0
          %530 = vmatpush1.xpose.msra.mxu0 0.0
          %531 = vmatprep.subr.mxu0 0.0
          %532 = vmatpush1.xpose.msra.mxu0 0.0
          %533 = vmatprep.subr.mxu0 0.0
          %534 = vmatpush1.xpose.msra.mxu0 0.0
          %535 = vmatprep.subr.mxu0 0.0
          %536 = vmatpush1.xpose.msra.mxu0 0.0
          %537 = vmatprep.subr.mxu0 0.0
          %538 = vmatpush1.xpose.msra.mxu0 0.0
          %539 = vmatprep.subr.mxu0 0.0
          %540 = vmatpush1.xpose.msra.mxu0 0.0
          %541 = vmatprep.subr.mxu0 0.0
          %542 = vmatpush1.xpose.msra.mxu0 0.0
          %543 = vmatprep.subr.mxu0 0.0
          %544 = vmatpush1.xpose.msra.mxu0 0.0
          %545 = vmatprep.subr.mxu0 0.0
          %546 = vmatpush1.xpose.msra.mxu0 0.0
          %547 = vmatprep.subr.mxu0 0.0
          %548 = vmatpush1.xpose.msra.mxu0 0.0
          %549 = vmatprep.subr.mxu0 0.0
          %550 = vmatpush1.xpose.msra.mxu0 0.0
          %551 = vmatprep.mubr.f32.mxu0 0.0
          %552 = vmatmul.mubr.f32.gmra.mrb[0].mxu0 %v416
          %v553 = vpop.f32.mrb[0].mxu0
          %v554 = vadd.f32 %v337, %v553
          %v555 = vpop.f32.mrb[0].mxu0
          %556 = vmatprep.mubr.f32.mxu0 0.0
          %557 = vmatmul.mubr.f32.gmra.mrb[0].mxu0 %v419
          %v558 = vpop.f32.mrb[0].mxu0
          %v559 = vadd.f32 %v342, %v558
          %v560 = vpop.f32.mrb[0].mxu0
          %561 = vmatprep.mubr.f32.mxu0 0.0
          %562 = vmatmul.mubr.f32.gmra.mrb[0].mxu0 %v422
          %v563 = vpop.f32.mrb[0].mxu0
          %v564 = vadd.f32 %v347, %v563
          %v565 = vpop.f32.mrb[0].mxu0
          %566 = vmatprep.mubr.f32.mxu0 0.0
          %567 = vmatmul.mubr.f32.gmra.mrb[0].mxu0 %v425
          %v568 = vpop.f32.mrb[0].mxu0
          %v569 = vadd.f32 %v352, %v568
          %v570 = vpop.f32.mrb[0].mxu0
          %571 = vmatprep.mubr.f32.mxu0 0.0
          %572 = vmatmul.mubr.f32.gmra.mrb[0].mxu0 %v428
          %v573 = vpop.f32.mrb[0].mxu0
          %v574 = vadd.f32 %v357, %v573
          %v575 = vpop.f32.mrb[0].mxu0
          %576 = vmatprep.mubr.f32.mxu0 0.0
          %577 = vmatmul.mubr.f32.gmra.mrb[0].mxu0 %v431
          %v578 = vpop.f32.mrb[0].mxu0
          %v579 = vadd.f32 %v362, %v578
          %v580 = vpop.f32.mrb[0].mxu0
          %581 = vmatprep.mubr.f32.mxu0 0.0
          %582 = vmatmul.mubr.f32.gmra.mrb[0].mxu0 %v434
          %v583 = vpop.f32.mrb[0].mxu0
          %v584 = vadd.f32 %v367, %v583
          %v585 = vpop.f32.mrb[0].mxu0
          %586 = vmatprep.mubr.f32.mxu0 0.0
          %587 = vmatmul.mubr.f32.gmra.mrb[0].mxu0 %v437
          %v588 = vpop.f32.mrb[0].mxu0
          %v589 = vadd.f32 %v372, %v588
          %v590 = vpop.f32.mrb[0].mxu0
          %591 = vmatprep.mubr.f32.mxu0 0.0
          %592 = vmatmul.mubr.f32.gmra.mrb[0].mxu0 %v440
          %v593 = vpop.f32.mrb[0].mxu0
          %v594 = vadd.f32 %v377, %v593
          %v595 = vpop.f32.mrb[0].mxu0
          %596 = vmatprep.mubr.f32.mxu0 0.0
          %597 = vmatmul.mubr.f32.gmra.mrb[0].mxu0 %v443
          %v598 = vpop.f32.mrb[0].mxu0
          %v599 = vadd.f32 %v382, %v598
          %v600 = vpop.f32.mrb[0].mxu0
          %601 = vmatprep.mubr.f32.mxu0 0.0
          %602 = vmatmul.mubr.f32.gmra.mrb[0].mxu0 %v446
          %v603 = vpop.f32.mrb[0].mxu0
          %v604 = vadd.f32 %v387, %v603
          %v605 = vpop.f32.mrb[0].mxu0
          %606 = vmatprep.mubr.f32.mxu0 0.0
          %607 = vmatmul.mubr.f32.gmra.mrb[0].mxu0 %v449
          %v608 = vpop.f32.mrb[0].mxu0
          %v609 = vadd.f32 %v392, %v608
          %v610 = vpop.f32.mrb[0].mxu0
          %611 = vmatprep.mubr.f32.mxu0 0.0
          %612 = vmatmul.mubr.f32.gmra.mrb[0].mxu0 %v452
          %v613 = vpop.f32.mrb[0].mxu0
          %v614 = vadd.f32 %v397, %v613
          %v615 = vpop.f32.mrb[0].mxu0
          %616 = vmatprep.mubr.f32.mxu0 0.0
          %617 = vmatmul.mubr.f32.gmra.mrb[0].mxu0 %v455
          %v618 = vpop.f32.mrb[0].mxu0
          %v619 = vadd.f32 %v402, %v618
          %v620 = vpop.f32.mrb[0].mxu0
          %621 = vmatprep.mubr.f32.mxu0 0.0
          %622 = vmatmul.mubr.f32.gmra.mrb[0].mxu0 %v458
          %v623 = vpop.f32.mrb[0].mxu0
          %v624 = vadd.f32 %v407, %v623
          %v625 = vpop.f32.mrb[0].mxu0
          %626 = vmatprep.mubr.f32.mxu0 0.0
          %627 = vmatmul.mubr.f32.gmra.mrb[0].mxu0 %v461
          %v628 = vpop.f32.mrb[0].mxu0
          %v629 = vadd.f32 %v412, %v628
          %v630 = vpop.f32.mrb[0].mxu0
          %631 = vdwg.mxu0
          %633 = vrot.lane.b32.xlu0 %v559, 64
          %v634 = vpop.permute.xlu0 %633
          %637 = vrot.lane.b32.xlu0 %v569, 64
          %v638 = vpop.permute.xlu0 %637
          %641 = vrot.lane.b32.xlu0 %v579, 64
          %v642 = vpop.permute.xlu0 %641
          %645 = vrot.lane.b32.xlu0 %v589, 64
          %v646 = vpop.permute.xlu0 %645
          %649 = vrot.lane.b32.xlu0 %v599, 64
          %v650 = vpop.permute.xlu0 %649
          %653 = vrot.lane.b32.xlu0 %v609, 64
          %v654 = vpop.permute.xlu0 %653
          %657 = vrot.lane.b32.xlu0 %v619, 64
          %v658 = vpop.permute.xlu0 %657
          %661 = vrot.lane.b32.xlu0 %v629, 64
          %v662 = vpop.permute.xlu0 %661
          %vm664 = vcmask 523264
          %v665 = vsel %vm664, %v554, %v634
          %v666 = vsel %vm664, %v564, %v638
          %v667 = vsel %vm664, %v574, %v642
          %v668 = vsel %vm664, %v584, %v646
          %v669 = vsel %vm664, %v594, %v650
          %v670 = vsel %vm664, %v604, %v654
          %v671 = vsel %vm664, %v614, %v658
          %v672 = vsel %vm664, %v624, %v662
          %673 = vst [vmem:[#allocation2] sm:$0xff] %v665
          %674 = vst [vmem:[#allocation2 + $0x8] sm:$0xff] %v666
          %675 = vst [vmem:[#allocation2 + $0x10] sm:$0xff] %v667
          %676 = vst [vmem:[#allocation2 + $0x18] sm:$0xff] %v668
          %677 = vst [vmem:[#allocation2 + $0x20] sm:$0xff] %v669
          %678 = vst [vmem:[#allocation2 + $0x28] sm:$0xff] %v670
          %679 = vst [vmem:[#allocation2 + $0x30] sm:$0xff] %v671
          %680 = vst [vmem:[#allocation2 + $0x38] sm:$0xff] %v672
          %v681 = vld [vmem:[%s1] sm:$0xff]
          %v682 = vld [vmem:[%s1 + $0x8] sm:$0xff]
          %v683 = vld [vmem:[%s1 + $0x10] sm:$0xff]
          %v684 = vld [vmem:[%s1 + $0x18] sm:$0xff]
          %v685 = vld [vmem:[%s1 + $0x20] sm:$0xff]
          %v686 = vld [vmem:[%s1 + $0x28] sm:$0xff]
          %v687 = vld [vmem:[%s1 + $0x30] sm:$0xff]
          %v688 = vld [vmem:[%s1 + $0x38] sm:$0xff]
          %v689 = vld [vmem:[%s1 + $0x40] sm:$0xff]
          %v690 = vld [vmem:[%s1 + $0x48] sm:$0xff]
          %v691 = vld [vmem:[%s1 + $0x50] sm:$0xff]
          %v692 = vld [vmem:[%s1 + $0x58] sm:$0xff]
          %v693 = vld [vmem:[%s1 + $0x60] sm:$0xff]
          %v694 = vld [vmem:[%s1 + $0x68] sm:$0xff]
          %v695 = vld [vmem:[%s1 + $0x70] sm:$0xff]
          %v696 = vld [vmem:[%s1 + $0x78] sm:$0xff]
          %s697 = scalar_lea.vmem %s279, 64
          %v698 = vld [vmem:[%s697] sm:$0xff]
          %v699 = vld [vmem:[%s697 + $0x8] sm:$0xff]
          %v700 = vld [vmem:[%s697 + $0x10] sm:$0xff]
          %v701 = vld [vmem:[%s697 + $0x18] sm:$0xff]
          %v702 = vld [vmem:[%s697 + $0x20] sm:$0xff]
          %v703 = vld [vmem:[%s697 + $0x28] sm:$0xff]
          %v704 = vld [vmem:[%s697 + $0x30] sm:$0xff]
          %v705 = vld [vmem:[%s697 + $0x38] sm:$0xff]
          %v706 = vld [vmem:[%s2] sm:$0xff]
          %v707 = vld [vmem:[%s2 + $0x8] sm:$0xff]
          %v708 = vld [vmem:[%s2 + $0x10] sm:$0xff]
          %v709 = vld [vmem:[%s2 + $0x18] sm:$0xff]
          %v710 = vld [vmem:[%s2 + $0x20] sm:$0xff]
          %v711 = vld [vmem:[%s2 + $0x28] sm:$0xff]
          %v712 = vld [vmem:[%s2 + $0x30] sm:$0xff]
          %v713 = vld [vmem:[%s2 + $0x38] sm:$0xff]
          %v714 = vld [vmem:[%s2 + $0x40] sm:$0xff]
          %v715 = vld [vmem:[%s2 + $0x48] sm:$0xff]
          %v716 = vld [vmem:[%s2 + $0x50] sm:$0xff]
          %v717 = vld [vmem:[%s2 + $0x58] sm:$0xff]
          %v718 = vld [vmem:[%s2 + $0x60] sm:$0xff]
          %v719 = vld [vmem:[%s2 + $0x68] sm:$0xff]
          %v720 = vld [vmem:[%s2 + $0x70] sm:$0xff]
          %v721 = vld [vmem:[%s2 + $0x78] sm:$0xff]
          %723 = vset.pattern.permute.xlu0 0
          %724 = vperm.xlu0 %723, %v706
          %v725 = vpop.permute.xlu0 %724
          %728 = vset.pattern.permute.xlu0 0
          %729 = vperm.xlu0 %728, %v707
          %v730 = vpop.permute.xlu0 %729
          %733 = vset.pattern.permute.xlu0 0
          %734 = vperm.xlu0 %733, %v708
          %v735 = vpop.permute.xlu0 %734
          %738 = vset.pattern.permute.xlu0 0
          %739 = vperm.xlu0 %738, %v709
          %v740 = vpop.permute.xlu0 %739
          %743 = vset.pattern.permute.xlu0 0
          %744 = vperm.xlu0 %743, %v710
          %v745 = vpop.permute.xlu0 %744
          %748 = vset.pattern.permute.xlu0 0
          %749 = vperm.xlu0 %748, %v711
          %v750 = vpop.permute.xlu0 %749
          %753 = vset.pattern.permute.xlu0 0
          %754 = vperm.xlu0 %753, %v712
          %v755 = vpop.permute.xlu0 %754
          %758 = vset.pattern.permute.xlu0 0
          %759 = vperm.xlu0 %758, %v713
          %v760 = vpop.permute.xlu0 %759
          %763 = vset.pattern.permute.xlu0 0
          %764 = vperm.xlu0 %763, %v714
          %v765 = vpop.permute.xlu0 %764
          %768 = vset.pattern.permute.xlu0 0
          %769 = vperm.xlu0 %768, %v715
          %v770 = vpop.permute.xlu0 %769
          %773 = vset.pattern.permute.xlu0 0
          %774 = vperm.xlu0 %773, %v716
          %v775 = vpop.permute.xlu0 %774
          %778 = vset.pattern.permute.xlu0 0
          %779 = vperm.xlu0 %778, %v717
          %v780 = vpop.permute.xlu0 %779
          %783 = vset.pattern.permute.xlu0 0
          %784 = vperm.xlu0 %783, %v718
          %v785 = vpop.permute.xlu0 %784
          %788 = vset.pattern.permute.xlu0 0
          %789 = vperm.xlu0 %788, %v719
          %v790 = vpop.permute.xlu0 %789
          %793 = vset.pattern.permute.xlu0 0
          %794 = vperm.xlu0 %793, %v720
          %v795 = vpop.permute.xlu0 %794
          %798 = vset.pattern.permute.xlu0 0
          %799 = vperm.xlu0 %798, %v721
          %v800 = vpop.permute.xlu0 %799
          %v803 = vsel %vm414, %v681, 0
          %v806 = vsel %vm414, %v682, 0
          %v809 = vsel %vm414, %v683, 0
          %v812 = vsel %vm414, %v684, 0
          %v815 = vsel %vm414, %v685, 0
          %v818 = vsel %vm414, %v686, 0
          %v821 = vsel %vm414, %v687, 0
          %v824 = vsel %vm414, %v688, 0
          %v827 = vsel %vm414, %v689, 0
          %v830 = vsel %vm414, %v690, 0
          %v833 = vsel %vm414, %v691, 0
          %v836 = vsel %vm414, %v692, 0
          %v839 = vsel %vm414, %v693, 0
          %v842 = vsel %vm414, %v694, 0
          %v845 = vsel %vm414, %v695, 0
          %v848 = vsel %vm414, %v696, 0
          %v851 = vsel %vm414, %v698, 0
          %v854 = vsel %vm414, %v699, 0
          %v857 = vsel %vm414, %v700, 0
          %v860 = vsel %vm414, %v701, 0
          %v863 = vsel %vm414, %v702, 0
          %v866 = vsel %vm414, %v703, 0
          %v869 = vsel %vm414, %v704, 0
          %v872 = vsel %vm414, %v705, 0
          %874 = vmatprep.subr.mxu0 0.0
          %875 = vmatpush1.xpose.msra.mxu0 %v851
          %876 = vmatprep.subr.mxu0 0.0
          %877 = vmatpush1.xpose.msra.mxu0 %v854
          %878 = vmatprep.subr.mxu0 0.0
          %879 = vmatpush1.xpose.msra.mxu0 %v857
          %880 = vmatprep.subr.mxu0 0.0
          %881 = vmatpush1.xpose.msra.mxu0 %v860
          %882 = vmatprep.subr.mxu0 0.0
          %883 = vmatpush1.xpose.msra.mxu0 %v863
          %884 = vmatprep.subr.mxu0 0.0
          %885 = vmatpush1.xpose.msra.mxu0 %v866
          %886 = vmatprep.subr.mxu0 0.0
          %887 = vmatpush1.xpose.msra.mxu0 %v869
          %888 = vmatprep.subr.mxu0 0.0
          %889 = vmatpush1.xpose.msra.mxu0 %v872
          %890 = vmatprep.subr.mxu0 0.0
          %891 = vmatpush1.xpose.msra.mxu0 0.0
          %892 = vmatprep.subr.mxu0 0.0
          %893 = vmatpush1.xpose.msra.mxu0 0.0
          %894 = vmatprep.subr.mxu0 0.0
          %895 = vmatpush1.xpose.msra.mxu0 0.0
          %896 = vmatprep.subr.mxu0 0.0
          %897 = vmatpush1.xpose.msra.mxu0 0.0
          %898 = vmatprep.subr.mxu0 0.0
          %899 = vmatpush1.xpose.msra.mxu0 0.0
          %900 = vmatprep.subr.mxu0 0.0
          %901 = vmatpush1.xpose.msra.mxu0 0.0
          %902 = vmatprep.subr.mxu0 0.0
          %903 = vmatpush1.xpose.msra.mxu0 0.0
          %904 = vmatprep.subr.mxu0 0.0
          %905 = vmatpush1.xpose.msra.mxu0 0.0
          %906 = vmatprep.subr.mxu0 0.0
          %907 = vmatpush1.xpose.msra.mxu0 0.0
          %908 = vmatprep.subr.mxu0 0.0
          %909 = vmatpush1.xpose.msra.mxu0 0.0
          %910 = vmatprep.subr.mxu0 0.0
          %911 = vmatpush1.xpose.msra.mxu0 0.0
          %912 = vmatprep.subr.mxu0 0.0
          %913 = vmatpush1.xpose.msra.mxu0 0.0
          %914 = vmatprep.subr.mxu0 0.0
          %915 = vmatpush1.xpose.msra.mxu0 0.0
          %916 = vmatprep.subr.mxu0 0.0
          %917 = vmatpush1.xpose.msra.mxu0 0.0
          %918 = vmatprep.subr.mxu0 0.0
          %919 = vmatpush1.xpose.msra.mxu0 0.0
          %920 = vmatprep.subr.mxu0 0.0
          %921 = vmatpush1.xpose.msra.mxu0 0.0
          %922 = vmatprep.subr.mxu0 0.0
          %923 = vmatpush1.xpose.msra.mxu0 0.0
          %924 = vmatprep.subr.mxu0 0.0
          %925 = vmatpush1.xpose.msra.mxu0 0.0
          %926 = vmatprep.subr.mxu0 0.0
          %927 = vmatpush1.xpose.msra.mxu0 0.0
          %928 = vmatprep.subr.mxu0 0.0
          %929 = vmatpush1.xpose.msra.mxu0 0.0
          %930 = vmatprep.subr.mxu0 0.0
          %931 = vmatpush1.xpose.msra.mxu0 0.0
          %932 = vmatprep.subr.mxu0 0.0
          %933 = vmatpush1.xpose.msra.mxu0 0.0
          %934 = vmatprep.subr.mxu0 0.0
          %935 = vmatpush1.xpose.msra.mxu0 0.0
          %936 = vmatprep.subr.mxu0 0.0
          %937 = vmatpush1.xpose.msra.mxu0 0.0
          %938 = vmatprep.mubr.f32.mxu0 0.0
          %939 = vmatmul.mubr.f32.gmra.mrb[0].mxu0 %v803
          %v940 = vpop.f32.mrb[0].mxu0
          %v941 = vadd.f32 %v725, %v940
          %v942 = vpop.f32.mrb[0].mxu0
          %943 = vmatprep.mubr.f32.mxu0 0.0
          %944 = vmatmul.mubr.f32.gmra.mrb[0].mxu0 %v806
          %v945 = vpop.f32.mrb[0].mxu0
          %v946 = vadd.f32 %v730, %v945
          %v947 = vpop.f32.mrb[0].mxu0
          %948 = vmatprep.mubr.f32.mxu0 0.0
          %949 = vmatmul.mubr.f32.gmra.mrb[0].mxu0 %v809
          %v950 = vpop.f32.mrb[0].mxu0
          %v951 = vadd.f32 %v735, %v950
          %v952 = vpop.f32.mrb[0].mxu0
          %953 = vmatprep.mubr.f32.mxu0 0.0
          %954 = vmatmul.mubr.f32.gmra.mrb[0].mxu0 %v812
          %v955 = vpop.f32.mrb[0].mxu0
          %v956 = vadd.f32 %v740, %v955
          %v957 = vpop.f32.mrb[0].mxu0
          %958 = vmatprep.mubr.f32.mxu0 0.0
          %959 = vmatmul.mubr.f32.gmra.mrb[0].mxu0 %v815
          %v960 = vpop.f32.mrb[0].mxu0
          %v961 = vadd.f32 %v745, %v960
          %v962 = vpop.f32.mrb[0].mxu0
          %963 = vmatprep.mubr.f32.mxu0 0.0
          %964 = vmatmul.mubr.f32.gmra.mrb[0].mxu0 %v818
          %v965 = vpop.f32.mrb[0].mxu0
          %v966 = vadd.f32 %v750, %v965
          %v967 = vpop.f32.mrb[0].mxu0
          %968 = vmatprep.mubr.f32.mxu0 0.0
          %969 = vmatmul.mubr.f32.gmra.mrb[0].mxu0 %v821
          %v970 = vpop.f32.mrb[0].mxu0
          %v971 = vadd.f32 %v755, %v970
          %v972 = vpop.f32.mrb[0].mxu0
          %973 = vmatprep.mubr.f32.mxu0 0.0
          %974 = vmatmul.mubr.f32.gmra.mrb[0].mxu0 %v824
          %v975 = vpop.f32.mrb[0].mxu0
          %v976 = vadd.f32 %v760, %v975
          %v977 = vpop.f32.mrb[0].mxu0
          %978 = vmatprep.mubr.f32.mxu0 0.0
          %979 = vmatmul.mubr.f32.gmra.mrb[0].mxu0 %v827
          %v980 = vpop.f32.mrb[0].mxu0
          %v981 = vadd.f32 %v765, %v980
          %v982 = vpop.f32.mrb[0].mxu0
          %983 = vmatprep.mubr.f32.mxu0 0.0
          %984 = vmatmul.mubr.f32.gmra.mrb[0].mxu0 %v830
          %v985 = vpop.f32.mrb[0].mxu0
          %v986 = vadd.f32 %v770, %v985
          %v987 = vpop.f32.mrb[0].mxu0
          %988 = vmatprep.mubr.f32.mxu0 0.0
          %989 = vmatmul.mubr.f32.gmra.mrb[0].mxu0 %v833
          %v990 = vpop.f32.mrb[0].mxu0
          %v991 = vadd.f32 %v775, %v990
          %v992 = vpop.f32.mrb[0].mxu0
          %993 = vmatprep.mubr.f32.mxu0 0.0
          %994 = vmatmul.mubr.f32.gmra.mrb[0].mxu0 %v836
          %v995 = vpop.f32.mrb[0].mxu0
          %v996 = vadd.f32 %v780, %v995
          %v997 = vpop.f32.mrb[0].mxu0
          %998 = vmatprep.mubr.f32.mxu0 0.0
          %999 = vmatmul.mubr.f32.gmra.mrb[0].mxu0 %v839
          %v1000 = vpop.f32.mrb[0].mxu0
          %v1001 = vadd.f32 %v785, %v1000
          %v1002 = vpop.f32.mrb[0].mxu0
          %1003 = vmatprep.mubr.f32.mxu0 0.0
          %1004 = vmatmul.mubr.f32.gmra.mrb[0].mxu0 %v842
          %v1005 = vpop.f32.mrb[0].mxu0
          %v1006 = vadd.f32 %v790, %v1005
          %v1007 = vpop.f32.mrb[0].mxu0
          %1008 = vmatprep.mubr.f32.mxu0 0.0
          %1009 = vmatmul.mubr.f32.gmra.mrb[0].mxu0 %v845
          %v1010 = vpop.f32.mrb[0].mxu0
          %v1011 = vadd.f32 %v795, %v1010
          %v1012 = vpop.f32.mrb[0].mxu0
          %1013 = vmatprep.mubr.f32.mxu0 0.0
          %1014 = vmatmul.mubr.f32.gmra.mrb[0].mxu0 %v848
          %v1015 = vpop.f32.mrb[0].mxu0
          %v1016 = vadd.f32 %v800, %v1015
          %v1017 = vpop.f32.mrb[0].mxu0
          %1018 = vdwg.mxu0
          %1020 = vrot.lane.b32.xlu0 %v946, 64
          %v1021 = vpop.permute.xlu0 %1020
          %1024 = vrot.lane.b32.xlu0 %v956, 64
          %v1025 = vpop.permute.xlu0 %1024
          %1028 = vrot.lane.b32.xlu0 %v966, 64
          %v1029 = vpop.permute.xlu0 %1028
          %1032 = vrot.lane.b32.xlu0 %v976, 64
          %v1033 = vpop.permute.xlu0 %1032
          %1036 = vrot.lane.b32.xlu0 %v986, 64
          %v1037 = vpop.permute.xlu0 %1036
          %1040 = vrot.lane.b32.xlu0 %v996, 64
          %v1041 = vpop.permute.xlu0 %1040
          %1044 = vrot.lane.b32.xlu0 %v1006, 64
          %v1045 = vpop.permute.xlu0 %1044
          %1048 = vrot.lane.b32.xlu0 %v1016, 64
          %v1049 = vpop.permute.xlu0 %1048
          %v1051 = vsel %vm664, %v941, %v1021
          %v1052 = vsel %vm664, %v951, %v1025
          %v1053 = vsel %vm664, %v961, %v1029
          %v1054 = vsel %vm664, %v971, %v1033
          %v1055 = vsel %vm664, %v981, %v1037
          %v1056 = vsel %vm664, %v991, %v1041
          %v1057 = vsel %vm664, %v1001, %v1045
          %v1058 = vsel %vm664, %v1011, %v1049
          %1059 = vst [vmem:[#allocation2 + $0x40] sm:$0xff] %v1051
          %1060 = vst [vmem:[#allocation2 + $0x48] sm:$0xff] %v1052
          %1061 = vst [vmem:[#allocation2 + $0x50] sm:$0xff] %v1053
          %1062 = vst [vmem:[#allocation2 + $0x58] sm:$0xff] %v1054
          %1063 = vst [vmem:[#allocation2 + $0x60] sm:$0xff] %v1055
          %1064 = vst [vmem:[#allocation2 + $0x68] sm:$0xff] %v1056
          %1065 = vst [vmem:[#allocation2 + $0x70] sm:$0xff] %v1057
          %1066 = vst [vmem:[#allocation2 + $0x78] sm:$0xff] %v1058
        $region48: #{tpu_custom_call.1} parent=39 // pred_fallthru
          _
        %v1067 = vld [vmem:[#allocation2] sm:$0xff]
        %v1068 = vld [vmem:[#allocation2 + $0x8] sm:$0xff]
        %v1069 = vld [vmem:[#allocation2 + $0x10] sm:$0xff]
        %v1070 = vld [vmem:[#allocation2 + $0x18] sm:$0xff]
        %v1071 = vld [vmem:[#allocation2 + $0x20] sm:$0xff]
        %v1072 = vld [vmem:[#allocation2 + $0x28] sm:$0xff]
        %v1073 = vld [vmem:[#allocation2 + $0x30] sm:$0xff]
        %v1074 = vld [vmem:[#allocation2 + $0x38] sm:$0xff]
        %v1075 = vld [vmem:[#allocation2 + $0x40] sm:$0xff]
        %v1076 = vld [vmem:[#allocation2 + $0x48] sm:$0xff]
        %v1077 = vld [vmem:[#allocation2 + $0x50] sm:$0xff]
        %v1078 = vld [vmem:[#allocation2 + $0x58] sm:$0xff]
        %v1079 = vld [vmem:[#allocation2 + $0x60] sm:$0xff]
        %v1080 = vld [vmem:[#allocation2 + $0x68] sm:$0xff]
        %v1081 = vld [vmem:[#allocation2 + $0x70] sm:$0xff]
        %v1082 = vld [vmem:[#allocation2 + $0x78] sm:$0xff]
        %v1083 = vpack.c.bf16 %v1075, %v1067
        %v1084 = vpack.c.bf16 %v1076, %v1068
        %v1085 = vpack.c.bf16 %v1077, %v1069
        %v1086 = vpack.c.bf16 %v1078, %v1070
        %v1087 = vpack.c.bf16 %v1079, %v1071
        %v1088 = vpack.c.bf16 %v1080, %v1072
        %v1089 = vpack.c.bf16 %v1081, %v1073
        %v1090 = vpack.c.bf16 %v1082, %v1074
        %v1091 = vld [vmem:[#allocation3] sm:$0xff]
        %v1092 = vld [vmem:[#allocation3 + $0x8] sm:$0xff]
        %v1093 = vld [vmem:[#allocation3 + $0x10] sm:$0xff]
        %v1094 = vld [vmem:[#allocation3 + $0x18] sm:$0xff]
        %v1095 = vld [vmem:[#allocation3 + $0x20] sm:$0xff]
        %v1096 = vld [vmem:[#allocation3 + $0x28] sm:$0xff]
        %v1097 = vld [vmem:[#allocation3 + $0x30] sm:$0xff]
        %v1098 = vld [vmem:[#allocation3 + $0x38] sm:$0xff]
        %v1099 = vld [vmem:[#allocation3 + $0x40] sm:$0xff]
        %v1100 = vld [vmem:[#allocation3 + $0x48] sm:$0xff]
        %v1101 = vld [vmem:[#allocation3 + $0x50] sm:$0xff]
        %v1102 = vld [vmem:[#allocation3 + $0x58] sm:$0xff]
        %v1103 = vld [vmem:[#allocation3 + $0x60] sm:$0xff]
        %v1104 = vld [vmem:[#allocation3 + $0x68] sm:$0xff]
        %v1105 = vld [vmem:[#allocation3 + $0x70] sm:$0xff]
        %v1106 = vld [vmem:[#allocation3 + $0x78] sm:$0xff]
        %v1107 = vld [vmem:[#allocation3 + $0x80] sm:$0xff]
        %v1108 = vld [vmem:[#allocation3 + $0x88] sm:$0xff]
        %v1109 = vld [vmem:[#allocation3 + $0x90] sm:$0xff]
        %v1110 = vld [vmem:[#allocation3 + $0x98] sm:$0xff]
        %v1111 = vld [vmem:[#allocation3 + $0xa0] sm:$0xff]
        %v1112 = vld [vmem:[#allocation3 + $0xa8] sm:$0xff]
        %v1113 = vld [vmem:[#allocation3 + $0xb0] sm:$0xff]
        %v1114 = vld [vmem:[#allocation3 + $0xb8] sm:$0xff]
        %v1115 = vld [vmem:[#allocation3 + $0xc0] sm:$0xff]
        %v1116 = vld [vmem:[#allocation3 + $0xc8] sm:$0xff]
        %v1117 = vld [vmem:[#allocation3 + $0xd0] sm:$0xff]
        %v1118 = vld [vmem:[#allocation3 + $0xd8] sm:$0xff]
        %v1119 = vld [vmem:[#allocation3 + $0xe0] sm:$0xff]
        %v1120 = vld [vmem:[#allocation3 + $0xe8] sm:$0xff]
        %v1121 = vld [vmem:[#allocation3 + $0xf0] sm:$0xff]
        %v1122 = vld [vmem:[#allocation3 + $0xf8] sm:$0xff]
        %v1123 = vld [vmem:[#allocation3 + $0x100] sm:$0xff]
        %v1124 = vld [vmem:[#allocation3 + $0x108] sm:$0xff]
        %v1125 = vld [vmem:[#allocation3 + $0x110] sm:$0xff]
        %v1126 = vld [vmem:[#allocation3 + $0x118] sm:$0xff]
        %v1127 = vld [vmem:[#allocation3 + $0x120] sm:$0xff]
        %v1128 = vld [vmem:[#allocation3 + $0x128] sm:$0xff]
        %v1129 = vld [vmem:[#allocation3 + $0x130] sm:$0xff]
        %v1130 = vld [vmem:[#allocation3 + $0x138] sm:$0xff]
        %v1131 = vld [vmem:[#allocation3 + $0x140] sm:$0xff]
        %v1132 = vld [vmem:[#allocation3 + $0x148] sm:$0xff]
        %v1133 = vld [vmem:[#allocation3 + $0x150] sm:$0xff]
        %v1134 = vld [vmem:[#allocation3 + $0x158] sm:$0xff]
        %v1135 = vld [vmem:[#allocation3 + $0x160] sm:$0xff]
        %v1136 = vld [vmem:[#allocation3 + $0x168] sm:$0xff]
        %v1137 = vld [vmem:[#allocation3 + $0x170] sm:$0xff]
        %v1138 = vld [vmem:[#allocation3 + $0x178] sm:$0xff]
        %v1139 = vld [vmem:[#allocation3 + $0x180] sm:$0xff]
        %v1140 = vld [vmem:[#allocation3 + $0x188] sm:$0xff]
        %v1141 = vld [vmem:[#allocation3 + $0x190] sm:$0xff]
        %v1142 = vld [vmem:[#allocation3 + $0x198] sm:$0xff]
        %v1143 = vld [vmem:[#allocation3 + $0x1a0] sm:$0xff]
        %v1144 = vld [vmem:[#allocation3 + $0x1a8] sm:$0xff]
        %v1145 = vld [vmem:[#allocation3 + $0x1b0] sm:$0xff]
        %v1146 = vld [vmem:[#allocation3 + $0x1b8] sm:$0xff]
        %v1147 = vld [vmem:[#allocation3 + $0x1c0] sm:$0xff]
        %v1148 = vld [vmem:[#allocation3 + $0x1c8] sm:$0xff]
        %v1149 = vld [vmem:[#allocation3 + $0x1d0] sm:$0xff]
        %v1150 = vld [vmem:[#allocation3 + $0x1d8] sm:$0xff]
        %v1151 = vld [vmem:[#allocation3 + $0x1e0] sm:$0xff]
        %v1152 = vld [vmem:[#allocation3 + $0x1e8] sm:$0xff]
        %v1153 = vld [vmem:[#allocation3 + $0x1f0] sm:$0xff]
        %v1154 = vld [vmem:[#allocation3 + $0x1f8] sm:$0xff]
        %v1155 = vld [vmem:[#allocation3 + $0x200] sm:$0xff]
        %v1156 = vld [vmem:[#allocation3 + $0x208] sm:$0xff]
        %v1157 = vld [vmem:[#allocation3 + $0x210] sm:$0xff]
        %v1158 = vld [vmem:[#allocation3 + $0x218] sm:$0xff]
        %v1159 = vld [vmem:[#allocation3 + $0x220] sm:$0xff]
        %v1160 = vld [vmem:[#allocation3 + $0x228] sm:$0xff]
        %v1161 = vld [vmem:[#allocation3 + $0x230] sm:$0xff]
        %v1162 = vld [vmem:[#allocation3 + $0x238] sm:$0xff]
        %v1163 = vld [vmem:[#allocation3 + $0x240] sm:$0xff]
        %v1164 = vld [vmem:[#allocation3 + $0x248] sm:$0xff]
        %v1165 = vld [vmem:[#allocation3 + $0x250] sm:$0xff]
        %v1166 = vld [vmem:[#allocation3 + $0x258] sm:$0xff]
        %v1167 = vld [vmem:[#allocation3 + $0x260] sm:$0xff]
        %v1168 = vld [vmem:[#allocation3 + $0x268] sm:$0xff]
        %v1169 = vld [vmem:[#allocation3 + $0x270] sm:$0xff]
        %v1170 = vld [vmem:[#allocation3 + $0x278] sm:$0xff]
        %v1171 = vld [vmem:[#allocation3 + $0x280] sm:$0xff]
        %v1172 = vld [vmem:[#allocation3 + $0x288] sm:$0xff]
        %v1173 = vld [vmem:[#allocation3 + $0x290] sm:$0xff]
        %v1174 = vld [vmem:[#allocation3 + $0x298] sm:$0xff]
        %v1175 = vld [vmem:[#allocation3 + $0x2a0] sm:$0xff]
        %v1176 = vld [vmem:[#allocation3 + $0x2a8] sm:$0xff]
        %v1177 = vld [vmem:[#allocation3 + $0x2b0] sm:$0xff]
        %v1178 = vld [vmem:[#allocation3 + $0x2b8] sm:$0xff]
        %v1179 = vld [vmem:[#allocation3 + $0x2c0] sm:$0xff]
        %v1180 = vld [vmem:[#allocation3 + $0x2c8] sm:$0xff]
        %v1181 = vld [vmem:[#allocation3 + $0x2d0] sm:$0xff]
        %v1182 = vld [vmem:[#allocation3 + $0x2d8] sm:$0xff]
        %v1183 = vld [vmem:[#allocation3 + $0x2e0] sm:$0xff]
        %v1184 = vld [vmem:[#allocation3 + $0x2e8] sm:$0xff]
        %v1185 = vld [vmem:[#allocation3 + $0x2f0] sm:$0xff]
        %v1186 = vld [vmem:[#allocation3 + $0x2f8] sm:$0xff]
        %v1187 = vld [vmem:[#allocation3 + $0x300] sm:$0xff]
        %v1188 = vld [vmem:[#allocation3 + $0x308] sm:$0xff]
        %v1189 = vld [vmem:[#allocation3 + $0x310] sm:$0xff]
        %v1190 = vld [vmem:[#allocation3 + $0x318] sm:$0xff]
        %v1191 = vld [vmem:[#allocation3 + $0x320] sm:$0xff]
        %v1192 = vld [vmem:[#allocation3 + $0x328] sm:$0xff]
        %v1193 = vld [vmem:[#allocation3 + $0x330] sm:$0xff]
        %v1194 = vld [vmem:[#allocation3 + $0x338] sm:$0xff]
        %v1195 = vld [vmem:[#allocation3 + $0x340] sm:$0xff]
        %v1196 = vld [vmem:[#allocation3 + $0x348] sm:$0xff]
        %v1197 = vld [vmem:[#allocation3 + $0x350] sm:$0xff]
        %v1198 = vld [vmem:[#allocation3 + $0x358] sm:$0xff]
        %v1199 = vld [vmem:[#allocation3 + $0x360] sm:$0xff]
        %v1200 = vld [vmem:[#allocation3 + $0x368] sm:$0xff]
        %v1201 = vld [vmem:[#allocation3 + $0x370] sm:$0xff]
        %v1202 = vld [vmem:[#allocation3 + $0x378] sm:$0xff]
        %v1203 = vld [vmem:[#allocation3 + $0x380] sm:$0xff]
        %v1204 = vld [vmem:[#allocation3 + $0x388] sm:$0xff]
        %v1205 = vld [vmem:[#allocation3 + $0x390] sm:$0xff]
        %v1206 = vld [vmem:[#allocation3 + $0x398] sm:$0xff]
        %v1207 = vld [vmem:[#allocation3 + $0x3a0] sm:$0xff]
        %v1208 = vld [vmem:[#allocation3 + $0x3a8] sm:$0xff]
        %v1209 = vld [vmem:[#allocation3 + $0x3b0] sm:$0xff]
        %v1210 = vld [vmem:[#allocation3 + $0x3b8] sm:$0xff]
        %v1211 = vld [vmem:[#allocation3 + $0x3c0] sm:$0xff]
        %v1212 = vld [vmem:[#allocation3 + $0x3c8] sm:$0xff]
        %v1213 = vld [vmem:[#allocation3 + $0x3d0] sm:$0xff]
        %v1214 = vld [vmem:[#allocation3 + $0x3d8] sm:$0xff]
        %v1215 = vld [vmem:[#allocation3 + $0x3e0] sm:$0xff]
        %v1216 = vld [vmem:[#allocation3 + $0x3e8] sm:$0xff]
        %v1217 = vld [vmem:[#allocation3 + $0x3f0] sm:$0xff]
        %v1218 = vld [vmem:[#allocation3 + $0x3f8] sm:$0xff]
        %v1219 = vld [vmem:[%s286] sm:$0xff]
        %v1220 = vld [vmem:[%s286 + $0x8] sm:$0xff]
        %v1221 = vld [vmem:[%s286 + $0x10] sm:$0xff]
        %v1222 = vld [vmem:[%s286 + $0x18] sm:$0xff]
        %v1351 = vunpack.c.l.b16 %v1091
        %v1352 = vunpack.c.h.b16 %v1091
        %v1353 = vunpack.c.l.b16 %v1092
        %v1354 = vunpack.c.h.b16 %v1092
        %v1355 = vunpack.c.l.b16 %v1093
        %v1356 = vunpack.c.h.b16 %v1093
        %v1357 = vunpack.c.l.b16 %v1094
        %v1358 = vunpack.c.h.b16 %v1094
        %v1359 = vunpack.c.l.b16 %v1095
        %v1360 = vunpack.c.h.b16 %v1095
        %v1361 = vunpack.c.l.b16 %v1096
        %v1362 = vunpack.c.h.b16 %v1096
        %v1363 = vunpack.c.l.b16 %v1097
        %v1364 = vunpack.c.h.b16 %v1097
        %v1365 = vunpack.c.l.b16 %v1098
        %v1366 = vunpack.c.h.b16 %v1098
        %v1367 = vunpack.c.l.b16 %v1099
        %v1368 = vunpack.c.h.b16 %v1099
        %v1369 = vunpack.c.l.b16 %v1100
        %v1370 = vunpack.c.h.b16 %v1100
        %v1371 = vunpack.c.l.b16 %v1101
        %v1372 = vunpack.c.h.b16 %v1101
        %v1373 = vunpack.c.l.b16 %v1102
        %v1374 = vunpack.c.h.b16 %v1102
        %v1375 = vunpack.c.l.b16 %v1103
        %v1376 = vunpack.c.h.b16 %v1103
        %v1377 = vunpack.c.l.b16 %v1104
        %v1378 = vunpack.c.h.b16 %v1104
        %v1379 = vunpack.c.l.b16 %v1105
        %v1380 = vunpack.c.h.b16 %v1105
        %v1381 = vunpack.c.l.b16 %v1106
        %v1382 = vunpack.c.h.b16 %v1106
        %v1383 = vunpack.c.l.b16 %v1107
        %v1384 = vunpack.c.h.b16 %v1107
        %v1385 = vunpack.c.l.b16 %v1108
        %v1386 = vunpack.c.h.b16 %v1108
        %v1387 = vunpack.c.l.b16 %v1109
        %v1388 = vunpack.c.h.b16 %v1109
        %v1389 = vunpack.c.l.b16 %v1110
        %v1390 = vunpack.c.h.b16 %v1110
        %v1391 = vunpack.c.l.b16 %v1111
        %v1392 = vunpack.c.h.b16 %v1111
        %v1393 = vunpack.c.l.b16 %v1112
        %v1394 = vunpack.c.h.b16 %v1112
        %v1395 = vunpack.c.l.b16 %v1113
        %v1396 = vunpack.c.h.b16 %v1113
        %v1397 = vunpack.c.l.b16 %v1114
        %v1398 = vunpack.c.h.b16 %v1114
        %v1399 = vunpack.c.l.b16 %v1115
        %v1400 = vunpack.c.h.b16 %v1115
        %v1401 = vunpack.c.l.b16 %v1116
        %v1402 = vunpack.c.h.b16 %v1116
        %v1403 = vunpack.c.l.b16 %v1117
        %v1404 = vunpack.c.h.b16 %v1117
        %v1405 = vunpack.c.l.b16 %v1118
        %v1406 = vunpack.c.h.b16 %v1118
        %v1407 = vunpack.c.l.b16 %v1119
        %v1408 = vunpack.c.h.b16 %v1119
        %v1409 = vunpack.c.l.b16 %v1120
        %v1410 = vunpack.c.h.b16 %v1120
        %v1411 = vunpack.c.l.b16 %v1121
        %v1412 = vunpack.c.h.b16 %v1121
        %v1413 = vunpack.c.l.b16 %v1122
        %v1414 = vunpack.c.h.b16 %v1122
        %v1415 = vunpack.c.l.b16 %v1123
        %v1416 = vunpack.c.h.b16 %v1123
        %v1417 = vunpack.c.l.b16 %v1124
        %v1418 = vunpack.c.h.b16 %v1124
        %v1419 = vunpack.c.l.b16 %v1125
        %v1420 = vunpack.c.h.b16 %v1125
        %v1421 = vunpack.c.l.b16 %v1126
        %v1422 = vunpack.c.h.b16 %v1126
        %v1423 = vunpack.c.l.b16 %v1127
        %v1424 = vunpack.c.h.b16 %v1127
        %v1425 = vunpack.c.l.b16 %v1128
        %v1426 = vunpack.c.h.b16 %v1128
        %v1427 = vunpack.c.l.b16 %v1129
        %v1428 = vunpack.c.h.b16 %v1129
        %v1429 = vunpack.c.l.b16 %v1130
        %v1430 = vunpack.c.h.b16 %v1130
        %v1431 = vunpack.c.l.b16 %v1131
        %v1432 = vunpack.c.h.b16 %v1131
        %v1433 = vunpack.c.l.b16 %v1132
        %v1434 = vunpack.c.h.b16 %v1132
        %v1435 = vunpack.c.l.b16 %v1133
        %v1436 = vunpack.c.h.b16 %v1133
        %v1437 = vunpack.c.l.b16 %v1134
        %v1438 = vunpack.c.h.b16 %v1134
        %v1439 = vunpack.c.l.b16 %v1135
        %v1440 = vunpack.c.h.b16 %v1135
        %v1441 = vunpack.c.l.b16 %v1136
        %v1442 = vunpack.c.h.b16 %v1136
        %v1443 = vunpack.c.l.b16 %v1137
        %v1444 = vunpack.c.h.b16 %v1137
        %v1445 = vunpack.c.l.b16 %v1138
        %v1446 = vunpack.c.h.b16 %v1138
        %v1447 = vunpack.c.l.b16 %v1139
        %v1448 = vunpack.c.h.b16 %v1139
        %v1449 = vunpack.c.l.b16 %v1140
        %v1450 = vunpack.c.h.b16 %v1140
        %v1451 = vunpack.c.l.b16 %v1141
        %v1452 = vunpack.c.h.b16 %v1141
        %v1453 = vunpack.c.l.b16 %v1142
        %v1454 = vunpack.c.h.b16 %v1142
        %v1455 = vunpack.c.l.b16 %v1143
        %v1456 = vunpack.c.h.b16 %v1143
        %v1457 = vunpack.c.l.b16 %v1144
        %v1458 = vunpack.c.h.b16 %v1144
        %v1459 = vunpack.c.l.b16 %v1145
        %v1460 = vunpack.c.h.b16 %v1145
        %v1461 = vunpack.c.l.b16 %v1146
        %v1462 = vunpack.c.h.b16 %v1146
        %v1463 = vunpack.c.l.b16 %v1147
        %v1464 = vunpack.c.h.b16 %v1147
        %v1465 = vunpack.c.l.b16 %v1148
        %v1466 = vunpack.c.h.b16 %v1148
        %v1467 = vunpack.c.l.b16 %v1149
        %v1468 = vunpack.c.h.b16 %v1149
        %v1469 = vunpack.c.l.b16 %v1150
        %v1470 = vunpack.c.h.b16 %v1150
        %v1471 = vunpack.c.l.b16 %v1151
        %v1472 = vunpack.c.h.b16 %v1151
        %v1473 = vunpack.c.l.b16 %v1152
        %v1474 = vunpack.c.h.b16 %v1152
        %v1475 = vunpack.c.l.b16 %v1153
        %v1476 = vunpack.c.h.b16 %v1153
        %v1477 = vunpack.c.l.b16 %v1154
        %v1478 = vunpack.c.h.b16 %v1154
        %v1479 = vunpack.c.l.b16 %v1155
        %v1480 = vunpack.c.h.b16 %v1155
        %v1481 = vunpack.c.l.b16 %v1156
        %v1482 = vunpack.c.h.b16 %v1156
        %v1483 = vunpack.c.l.b16 %v1157
        %v1484 = vunpack.c.h.b16 %v1157
        %v1485 = vunpack.c.l.b16 %v1158
        %v1486 = vunpack.c.h.b16 %v1158
        %v1487 = vunpack.c.l.b16 %v1159
        %v1488 = vunpack.c.h.b16 %v1159
        %v1489 = vunpack.c.l.b16 %v1160
        %v1490 = vunpack.c.h.b16 %v1160
        %v1491 = vunpack.c.l.b16 %v1161
        %v1492 = vunpack.c.h.b16 %v1161
        %v1493 = vunpack.c.l.b16 %v1162
        %v1494 = vunpack.c.h.b16 %v1162
        %v1495 = vunpack.c.l.b16 %v1163
        %v1496 = vunpack.c.h.b16 %v1163
        %v1497 = vunpack.c.l.b16 %v1164
        %v1498 = vunpack.c.h.b16 %v1164
        %v1499 = vunpack.c.l.b16 %v1165
        %v1500 = vunpack.c.h.b16 %v1165
        %v1501 = vunpack.c.l.b16 %v1166
        %v1502 = vunpack.c.h.b16 %v1166
        %v1503 = vunpack.c.l.b16 %v1167
        %v1504 = vunpack.c.h.b16 %v1167
        %v1505 = vunpack.c.l.b16 %v1168
        %v1506 = vunpack.c.h.b16 %v1168
        %v1507 = vunpack.c.l.b16 %v1169
        %v1508 = vunpack.c.h.b16 %v1169
        %v1509 = vunpack.c.l.b16 %v1170
        %v1510 = vunpack.c.h.b16 %v1170
        %v1511 = vunpack.c.l.b16 %v1171
        %v1512 = vunpack.c.h.b16 %v1171
        %v1513 = vunpack.c.l.b16 %v1172
        %v1514 = vunpack.c.h.b16 %v1172
        %v1515 = vunpack.c.l.b16 %v1173
        %v1516 = vunpack.c.h.b16 %v1173
        %v1517 = vunpack.c.l.b16 %v1174
        %v1518 = vunpack.c.h.b16 %v1174
        %v1519 = vunpack.c.l.b16 %v1175
        %v1520 = vunpack.c.h.b16 %v1175
        %v1521 = vunpack.c.l.b16 %v1176
        %v1522 = vunpack.c.h.b16 %v1176
        %v1523 = vunpack.c.l.b16 %v1177
        %v1524 = vunpack.c.h.b16 %v1177
        %v1525 = vunpack.c.l.b16 %v1178
        %v1526 = vunpack.c.h.b16 %v1178
        %v1527 = vunpack.c.l.b16 %v1179
        %v1528 = vunpack.c.h.b16 %v1179
        %v1529 = vunpack.c.l.b16 %v1180
        %v1530 = vunpack.c.h.b16 %v1180
        %v1531 = vunpack.c.l.b16 %v1181
        %v1532 = vunpack.c.h.b16 %v1181
        %v1533 = vunpack.c.l.b16 %v1182
        %v1534 = vunpack.c.h.b16 %v1182
        %v1535 = vunpack.c.l.b16 %v1183
        %v1536 = vunpack.c.h.b16 %v1183
        %v1537 = vunpack.c.l.b16 %v1184
        %v1538 = vunpack.c.h.b16 %v1184
        %v1539 = vunpack.c.l.b16 %v1185
        %v1540 = vunpack.c.h.b16 %v1185
        %v1541 = vunpack.c.l.b16 %v1186
        %v1542 = vunpack.c.h.b16 %v1186
        %v1543 = vunpack.c.l.b16 %v1187
        %v1544 = vunpack.c.h.b16 %v1187
        %v1545 = vunpack.c.l.b16 %v1188
        %v1546 = vunpack.c.h.b16 %v1188
        %v1547 = vunpack.c.l.b16 %v1189
        %v1548 = vunpack.c.h.b16 %v1189
        %v1549 = vunpack.c.l.b16 %v1190
        %v1550 = vunpack.c.h.b16 %v1190
        %v1551 = vunpack.c.l.b16 %v1191
        %v1552 = vunpack.c.h.b16 %v1191
        %v1553 = vunpack.c.l.b16 %v1192
        %v1554 = vunpack.c.h.b16 %v1192
        %v1555 = vunpack.c.l.b16 %v1193
        %v1556 = vunpack.c.h.b16 %v1193
        %v1557 = vunpack.c.l.b16 %v1194
        %v1558 = vunpack.c.h.b16 %v1194
        %v1559 = vunpack.c.l.b16 %v1195
        %v1560 = vunpack.c.h.b16 %v1195
        %v1561 = vunpack.c.l.b16 %v1196
        %v1562 = vunpack.c.h.b16 %v1196
        %v1563 = vunpack.c.l.b16 %v1197
        %v1564 = vunpack.c.h.b16 %v1197
        %v1565 = vunpack.c.l.b16 %v1198
        %v1566 = vunpack.c.h.b16 %v1198
        %v1567 = vunpack.c.l.b16 %v1199
        %v1568 = vunpack.c.h.b16 %v1199
        %v1569 = vunpack.c.l.b16 %v1200
        %v1570 = vunpack.c.h.b16 %v1200
        %v1571 = vunpack.c.l.b16 %v1201
        %v1572 = vunpack.c.h.b16 %v1201
        %v1573 = vunpack.c.l.b16 %v1202
        %v1574 = vunpack.c.h.b16 %v1202
        %v1575 = vunpack.c.l.b16 %v1203
        %v1576 = vunpack.c.h.b16 %v1203
        %v1577 = vunpack.c.l.b16 %v1204
        %v1578 = vunpack.c.h.b16 %v1204
        %v1579 = vunpack.c.l.b16 %v1205
        %v1580 = vunpack.c.h.b16 %v1205
        %v1581 = vunpack.c.l.b16 %v1206
        %v1582 = vunpack.c.h.b16 %v1206
        %v1583 = vunpack.c.l.b16 %v1207
        %v1584 = vunpack.c.h.b16 %v1207
        %v1585 = vunpack.c.l.b16 %v1208
        %v1586 = vunpack.c.h.b16 %v1208
        %v1587 = vunpack.c.l.b16 %v1209
        %v1588 = vunpack.c.h.b16 %v1209
        %v1589 = vunpack.c.l.b16 %v1210
        %v1590 = vunpack.c.h.b16 %v1210
        %v1591 = vunpack.c.l.b16 %v1211
        %v1592 = vunpack.c.h.b16 %v1211
        %v1593 = vunpack.c.l.b16 %v1212
        %v1594 = vunpack.c.h.b16 %v1212
        %v1595 = vunpack.c.l.b16 %v1213
        %v1596 = vunpack.c.h.b16 %v1213
        %v1597 = vunpack.c.l.b16 %v1214
        %v1598 = vunpack.c.h.b16 %v1214
        %v1599 = vunpack.c.l.b16 %v1215
        %v1600 = vunpack.c.h.b16 %v1215
        %v1601 = vunpack.c.l.b16 %v1216
        %v1602 = vunpack.c.h.b16 %v1216
        %v1603 = vunpack.c.l.b16 %v1217
        %v1604 = vunpack.c.h.b16 %v1217
        %v1605 = vunpack.c.l.b16 %v1218
        %v1606 = vunpack.c.h.b16 %v1218
        %v1607 = vpack.c.b16 %v1353, %v1351
        %v1608 = vpack.c.b16 %v1354, %v1352
        %v1609 = vpack.c.b16 %v1357, %v1355
        %v1610 = vpack.c.b16 %v1358, %v1356
        %v1611 = vpack.c.b16 %v1361, %v1359
        %v1612 = vpack.c.b16 %v1362, %v1360
        %v1613 = vpack.c.b16 %v1365, %v1363
        %v1614 = vpack.c.b16 %v1366, %v1364
        %v1615 = vpack.c.b16 %v1369, %v1367
        %v1616 = vpack.c.b16 %v1370, %v1368
        %v1617 = vpack.c.b16 %v1373, %v1371
        %v1618 = vpack.c.b16 %v1374, %v1372
        %v1619 = vpack.c.b16 %v1377, %v1375
        %v1620 = vpack.c.b16 %v1378, %v1376
        %v1621 = vpack.c.b16 %v1381, %v1379
        %v1622 = vpack.c.b16 %v1382, %v1380
        %v1623 = vpack.c.b16 %v1385, %v1383
        %v1624 = vpack.c.b16 %v1386, %v1384
        %v1625 = vpack.c.b16 %v1389, %v1387
        %v1626 = vpack.c.b16 %v1390, %v1388
        %v1627 = vpack.c.b16 %v1393, %v1391
        %v1628 = vpack.c.b16 %v1394, %v1392
        %v1629 = vpack.c.b16 %v1397, %v1395
        %v1630 = vpack.c.b16 %v1398, %v1396
        %v1631 = vpack.c.b16 %v1401, %v1399
        %v1632 = vpack.c.b16 %v1402, %v1400
        %v1633 = vpack.c.b16 %v1405, %v1403
        %v1634 = vpack.c.b16 %v1406, %v1404
        %v1635 = vpack.c.b16 %v1409, %v1407
        %v1636 = vpack.c.b16 %v1410, %v1408
        %v1637 = vpack.c.b16 %v1413, %v1411
        %v1638 = vpack.c.b16 %v1414, %v1412
        %v1639 = vpack.c.b16 %v1417, %v1415
        %v1640 = vpack.c.b16 %v1418, %v1416
        %v1641 = vpack.c.b16 %v1421, %v1419
        %v1642 = vpack.c.b16 %v1422, %v1420
        %v1643 = vpack.c.b16 %v1425, %v1423
        %v1644 = vpack.c.b16 %v1426, %v1424
        %v1645 = vpack.c.b16 %v1429, %v1427
        %v1646 = vpack.c.b16 %v1430, %v1428
        %v1647 = vpack.c.b16 %v1433, %v1431
        %v1648 = vpack.c.b16 %v1434, %v1432
        %v1649 = vpack.c.b16 %v1437, %v1435
        %v1650 = vpack.c.b16 %v1438, %v1436
        %v1651 = vpack.c.b16 %v1441, %v1439
        %v1652 = vpack.c.b16 %v1442, %v1440
        %v1653 = vpack.c.b16 %v1445, %v1443
        %v1654 = vpack.c.b16 %v1446, %v1444
        %v1655 = vpack.c.b16 %v1449, %v1447
        %v1656 = vpack.c.b16 %v1450, %v1448
        %v1657 = vpack.c.b16 %v1453, %v1451
        %v1658 = vpack.c.b16 %v1454, %v1452
        %v1659 = vpack.c.b16 %v1457, %v1455
        %v1660 = vpack.c.b16 %v1458, %v1456
        %v1661 = vpack.c.b16 %v1461, %v1459
        %v1662 = vpack.c.b16 %v1462, %v1460
        %v1663 = vpack.c.b16 %v1465, %v1463
        %v1664 = vpack.c.b16 %v1466, %v1464
        %v1665 = vpack.c.b16 %v1469, %v1467
        %v1666 = vpack.c.b16 %v1470, %v1468
        %v1667 = vpack.c.b16 %v1473, %v1471
        %v1668 = vpack.c.b16 %v1474, %v1472
        %v1669 = vpack.c.b16 %v1477, %v1475
        %v1670 = vpack.c.b16 %v1478, %v1476
        %v1671 = vpack.c.b16 %v1481, %v1479
        %v1672 = vpack.c.b16 %v1482, %v1480
        %v1673 = vpack.c.b16 %v1485, %v1483
        %v1674 = vpack.c.b16 %v1486, %v1484
        %v1675 = vpack.c.b16 %v1489, %v1487
        %v1676 = vpack.c.b16 %v1490, %v1488
        %v1677 = vpack.c.b16 %v1493, %v1491
        %v1678 = vpack.c.b16 %v1494, %v1492
        %v1679 = vpack.c.b16 %v1497, %v1495
        %v1680 = vpack.c.b16 %v1498, %v1496
        %v1681 = vpack.c.b16 %v1501, %v1499
        %v1682 = vpack.c.b16 %v1502, %v1500
        %v1683 = vpack.c.b16 %v1505, %v1503
        %v1684 = vpack.c.b16 %v1506, %v1504
        %v1685 = vpack.c.b16 %v1509, %v1507
        %v1686 = vpack.c.b16 %v1510, %v1508
        %v1687 = vpack.c.b16 %v1513, %v1511
        %v1688 = vpack.c.b16 %v1514, %v1512
        %v1689 = vpack.c.b16 %v1517, %v1515
        %v1690 = vpack.c.b16 %v1518, %v1516
        %v1691 = vpack.c.b16 %v1521, %v1519
        %v1692 = vpack.c.b16 %v1522, %v1520
        %v1693 = vpack.c.b16 %v1525, %v1523
        %v1694 = vpack.c.b16 %v1526, %v1524
        %v1695 = vpack.c.b16 %v1529, %v1527
        %v1696 = vpack.c.b16 %v1530, %v1528
        %v1697 = vpack.c.b16 %v1533, %v1531
        %v1698 = vpack.c.b16 %v1534, %v1532
        %v1699 = vpack.c.b16 %v1537, %v1535
        %v1700 = vpack.c.b16 %v1538, %v1536
        %v1701 = vpack.c.b16 %v1541, %v1539
        %v1702 = vpack.c.b16 %v1542, %v1540
        %v1703 = vpack.c.b16 %v1545, %v1543
        %v1704 = vpack.c.b16 %v1546, %v1544
        %v1705 = vpack.c.b16 %v1549, %v1547
        %v1706 = vpack.c.b16 %v1550, %v1548
        %v1707 = vpack.c.b16 %v1553, %v1551
        %v1708 = vpack.c.b16 %v1554, %v1552
        %v1709 = vpack.c.b16 %v1557, %v1555
        %v1710 = vpack.c.b16 %v1558, %v1556
        %v1711 = vpack.c.b16 %v1561, %v1559
        %v1712 = vpack.c.b16 %v1562, %v1560
        %v1713 = vpack.c.b16 %v1565, %v1563
        %v1714 = vpack.c.b16 %v1566, %v1564
        %v1715 = vpack.c.b16 %v1569, %v1567
        %v1716 = vpack.c.b16 %v1570, %v1568
        %v1717 = vpack.c.b16 %v1573, %v1571
        %v1718 = vpack.c.b16 %v1574, %v1572
        %v1719 = vpack.c.b16 %v1577, %v1575
        %v1720 = vpack.c.b16 %v1578, %v1576
        %v1721 = vpack.c.b16 %v1581, %v1579
        %v1722 = vpack.c.b16 %v1582, %v1580
        %v1723 = vpack.c.b16 %v1585, %v1583
        %v1724 = vpack.c.b16 %v1586, %v1584
        %v1725 = vpack.c.b16 %v1589, %v1587
        %v1726 = vpack.c.b16 %v1590, %v1588
        %v1727 = vpack.c.b16 %v1593, %v1591
        %v1728 = vpack.c.b16 %v1594, %v1592
        %v1729 = vpack.c.b16 %v1597, %v1595
        %v1730 = vpack.c.b16 %v1598, %v1596
        %v1731 = vpack.c.b16 %v1601, %v1599
        %v1732 = vpack.c.b16 %v1602, %v1600
        %v1733 = vpack.c.b16 %v1605, %v1603
        %v1734 = vpack.c.b16 %v1606, %v1604
        %1863 = vmatprep.subr.bf16.mxu0 %v1608
        %1864 = vmatpush1.bf16.msra.mxu0 %v1607
        %1865 = vmatprep.subr.bf16.mxu0 %v1610
        %1866 = vmatpush1.bf16.msra.mxu0 %v1609
        %1867 = vmatprep.subr.bf16.mxu0 %v1612
        %1868 = vmatpush1.bf16.msra.mxu0 %v1611
        %1869 = vmatprep.subr.bf16.mxu0 %v1614
        %1870 = vmatpush1.bf16.msra.mxu0 %v1613
        %1871 = vmatprep.subr.bf16.mxu0 %v1616
        %1872 = vmatpush1.bf16.msra.mxu0 %v1615
        %1873 = vmatprep.subr.bf16.mxu0 %v1618
        %1874 = vmatpush1.bf16.msra.mxu0 %v1617
        %1875 = vmatprep.subr.bf16.mxu0 %v1620
        %1876 = vmatpush1.bf16.msra.mxu0 %v1619
        %1877 = vmatprep.subr.bf16.mxu0 %v1622
        %1878 = vmatpush1.bf16.msra.mxu0 %v1621
        %1879 = vmatprep.subr.bf16.mxu0 %v1624
        %1880 = vmatpush1.bf16.msra.mxu0 %v1623
        %1881 = vmatprep.subr.bf16.mxu0 %v1626
        %1882 = vmatpush1.bf16.msra.mxu0 %v1625
        %1883 = vmatprep.subr.bf16.mxu0 %v1628
        %1884 = vmatpush1.bf16.msra.mxu0 %v1627
        %1885 = vmatprep.subr.bf16.mxu0 %v1630
        %1886 = vmatpush1.bf16.msra.mxu0 %v1629
        %1887 = vmatprep.subr.bf16.mxu0 %v1632
        %1888 = vmatpush1.bf16.msra.mxu0 %v1631
        %1889 = vmatprep.subr.bf16.mxu0 %v1634
        %1890 = vmatpush1.bf16.msra.mxu0 %v1633
        %1891 = vmatprep.subr.bf16.mxu0 %v1636
        %1892 = vmatpush1.bf16.msra.mxu0 %v1635
        %1893 = vmatprep.subr.bf16.mxu0 %v1638
        %1894 = vmatpush1.bf16.msra.mxu0 %v1637
        %1895 = vmatprep.mubr.bf16.mxu0 %v1084
        %1896 = vmatmul.mubr.bf16.gmra.mrb[0].mxu0 %v1083
        %v1897 = vpop.f32.mrb[0].mxu0
        %v1898 = vadd.f32 %v1219, %v1897
        %v1899 = vpop.f32.mrb[0].mxu0
        %v1900 = vadd.f32 %v1220, %v1899
        %v1901 = vpop.f32.mrb[0].mxu0
        %v1902 = vadd.f32 %v1221, %v1901
        %v1903 = vpop.f32.mrb[0].mxu0
        %v1904 = vadd.f32 %v1222, %v1903
        %1905 = vdwg.mxu0
        %1906 = vmatprep.subr.bf16.mxu0 %v1640
        %1907 = vmatpush1.bf16.msra.mxu0 %v1639
        %1908 = vmatprep.subr.bf16.mxu0 %v1642
        %1909 = vmatpush1.bf16.msra.mxu0 %v1641
        %1910 = vmatprep.subr.bf16.mxu0 %v1644
        %1911 = vmatpush1.bf16.msra.mxu0 %v1643
        %1912 = vmatprep.subr.bf16.mxu0 %v1646
        %1913 = vmatpush1.bf16.msra.mxu0 %v1645
        %1914 = vmatprep.subr.bf16.mxu0 %v1648
        %1915 = vmatpush1.bf16.msra.mxu0 %v1647
        %1916 = vmatprep.subr.bf16.mxu0 %v1650
        %1917 = vmatpush1.bf16.msra.mxu0 %v1649
        %1918 = vmatprep.subr.bf16.mxu0 %v1652
        %1919 = vmatpush1.bf16.msra.mxu0 %v1651
        %1920 = vmatprep.subr.bf16.mxu0 %v1654
        %1921 = vmatpush1.bf16.msra.mxu0 %v1653
        %1922 = vmatprep.subr.bf16.mxu0 %v1656
        %1923 = vmatpush1.bf16.msra.mxu0 %v1655
        %1924 = vmatprep.subr.bf16.mxu0 %v1658
        %1925 = vmatpush1.bf16.msra.mxu0 %v1657
        %1926 = vmatprep.subr.bf16.mxu0 %v1660
        %1927 = vmatpush1.bf16.msra.mxu0 %v1659
        %1928 = vmatprep.subr.bf16.mxu0 %v1662
        %1929 = vmatpush1.bf16.msra.mxu0 %v1661
        %1930 = vmatprep.subr.bf16.mxu0 %v1664
        %1931 = vmatpush1.bf16.msra.mxu0 %v1663
        %1932 = vmatprep.subr.bf16.mxu0 %v1666
        %1933 = vmatpush1.bf16.msra.mxu0 %v1665
        %1934 = vmatprep.subr.bf16.mxu0 %v1668
        %1935 = vmatpush1.bf16.msra.mxu0 %v1667
        %1936 = vmatprep.subr.bf16.mxu0 %v1670
        %1937 = vmatpush1.bf16.msra.mxu0 %v1669
        %1938 = vmatprep.mubr.bf16.mxu0 %v1086
        %1939 = vmatmul.mubr.bf16.gmra.mrb[0].mxu0 %v1085
        %v1940 = vpop.f32.mrb[0].mxu0
        %v1941 = vadd.f32 %v1898, %v1940
        %v1942 = vpop.f32.mrb[0].mxu0
        %v1943 = vadd.f32 %v1900, %v1942
        %v1944 = vpop.f32.mrb[0].mxu0
        %v1945 = vadd.f32 %v1902, %v1944
        %v1946 = vpop.f32.mrb[0].mxu0
        %v1947 = vadd.f32 %v1904, %v1946
        %1948 = vdwg.mxu0
        %1949 = vmatprep.subr.bf16.mxu0 %v1672
        %1950 = vmatpush1.bf16.msra.mxu0 %v1671
        %1951 = vmatprep.subr.bf16.mxu0 %v1674
        %1952 = vmatpush1.bf16.msra.mxu0 %v1673
        %1953 = vmatprep.subr.bf16.mxu0 %v1676
        %1954 = vmatpush1.bf16.msra.mxu0 %v1675
        %1955 = vmatprep.subr.bf16.mxu0 %v1678
        %1956 = vmatpush1.bf16.msra.mxu0 %v1677
        %1957 = vmatprep.subr.bf16.mxu0 %v1680
        %1958 = vmatpush1.bf16.msra.mxu0 %v1679
        %1959 = vmatprep.subr.bf16.mxu0 %v1682
        %1960 = vmatpush1.bf16.msra.mxu0 %v1681
        %1961 = vmatprep.subr.bf16.mxu0 %v1684
        %1962 = vmatpush1.bf16.msra.mxu0 %v1683
        %1963 = vmatprep.subr.bf16.mxu0 %v1686
        %1964 = vmatpush1.bf16.msra.mxu0 %v1685
        %1965 = vmatprep.subr.bf16.mxu0 %v1688
        %1966 = vmatpush1.bf16.msra.mxu0 %v1687
        %1967 = vmatprep.subr.bf16.mxu0 %v1690
        %1968 = vmatpush1.bf16.msra.mxu0 %v1689
        %1969 = vmatprep.subr.bf16.mxu0 %v1692
        %1970 = vmatpush1.bf16.msra.mxu0 %v1691
        %1971 = vmatprep.subr.bf16.mxu0 %v1694
        %1972 = vmatpush1.bf16.msra.mxu0 %v1693
        %1973 = vmatprep.subr.bf16.mxu0 %v1696
        %1974 = vmatpush1.bf16.msra.mxu0 %v1695
        %1975 = vmatprep.subr.bf16.mxu0 %v1698
        %1976 = vmatpush1.bf16.msra.mxu0 %v1697
        %1977 = vmatprep.subr.bf16.mxu0 %v1700
        %1978 = vmatpush1.bf16.msra.mxu0 %v1699
        %1979 = vmatprep.subr.bf16.mxu0 %v1702
        %1980 = vmatpush1.bf16.msra.mxu0 %v1701
        %1981 = vmatprep.mubr.bf16.mxu0 %v1088
        %1982 = vmatmul.mubr.bf16.gmra.mrb[0].mxu0 %v1087
        %v1983 = vpop.f32.mrb[0].mxu0
        %v1984 = vadd.f32 %v1941, %v1983
        %v1985 = vpop.f32.mrb[0].mxu0
        %v1986 = vadd.f32 %v1943, %v1985
        %v1987 = vpop.f32.mrb[0].mxu0
        %v1988 = vadd.f32 %v1945, %v1987
        %v1989 = vpop.f32.mrb[0].mxu0
        %v1990 = vadd.f32 %v1947, %v1989
        %1991 = vdwg.mxu0
        %1992 = vmatprep.subr.bf16.mxu0 %v1704
        %1993 = vmatpush1.bf16.msra.mxu0 %v1703
        %1994 = vmatprep.subr.bf16.mxu0 %v1706
        %1995 = vmatpush1.bf16.msra.mxu0 %v1705
        %1996 = vmatprep.subr.bf16.mxu0 %v1708
        %1997 = vmatpush1.bf16.msra.mxu0 %v1707
        %1998 = vmatprep.subr.bf16.mxu0 %v1710
        %1999 = vmatpush1.bf16.msra.mxu0 %v1709
        %2000 = vmatprep.subr.bf16.mxu0 %v1712
        %2001 = vmatpush1.bf16.msra.mxu0 %v1711
        %2002 = vmatprep.subr.bf16.mxu0 %v1714
        %2003 = vmatpush1.bf16.msra.mxu0 %v1713
        %2004 = vmatprep.subr.bf16.mxu0 %v1716
        %2005 = vmatpush1.bf16.msra.mxu0 %v1715
        %2006 = vmatprep.subr.bf16.mxu0 %v1718
        %2007 = vmatpush1.bf16.msra.mxu0 %v1717
        %2008 = vmatprep.subr.bf16.mxu0 %v1720
        %2009 = vmatpush1.bf16.msra.mxu0 %v1719
        %2010 = vmatprep.subr.bf16.mxu0 %v1722
        %2011 = vmatpush1.bf16.msra.mxu0 %v1721
        %2012 = vmatprep.subr.bf16.mxu0 %v1724
        %2013 = vmatpush1.bf16.msra.mxu0 %v1723
        %2014 = vmatprep.subr.bf16.mxu0 %v1726
        %2015 = vmatpush1.bf16.msra.mxu0 %v1725
        %2016 = vmatprep.subr.bf16.mxu0 %v1728
        %2017 = vmatpush1.bf16.msra.mxu0 %v1727
        %2018 = vmatprep.subr.bf16.mxu0 %v1730
        %2019 = vmatpush1.bf16.msra.mxu0 %v1729
        %2020 = vmatprep.subr.bf16.mxu0 %v1732
        %2021 = vmatpush1.bf16.msra.mxu0 %v1731
        %2022 = vmatprep.subr.bf16.mxu0 %v1734
        %2023 = vmatpush1.bf16.msra.mxu0 %v1733
        %2024 = vmatprep.mubr.bf16.mxu0 %v1090
        %2025 = vmatmul.mubr.bf16.gmra.mrb[0].mxu0 %v1089
        %v2026 = vpop.f32.mrb[0].mxu0
        %v2027 = vadd.f32 %v1984, %v2026
        %v2028 = vpop.f32.mrb[0].mxu0
        %v2029 = vadd.f32 %v1986, %v2028
        %v2030 = vpop.f32.mrb[0].mxu0
        %v2031 = vadd.f32 %v1988, %v2030
        %v2032 = vpop.f32.mrb[0].mxu0
        %v2033 = vadd.f32 %v1990, %v2032
        %2034 = vdwg.mxu0
        %2035 = vst [vmem:[%s273] sm:$0xff] %v2027
        %2036 = vst [vmem:[%s273 + $0x8] sm:$0xff] %v2029
        %2037 = vst [vmem:[%s273 + $0x10] sm:$0xff] %v2031
        %2038 = vst [vmem:[%s273 + $0x18] sm:$0xff] %v2033
        %s2039 = sand.u32 %s162, 1
        %s2040 = scalar_lea.sflag [#allocation5], %s2039
        %s2041 = sand.u32 %s162, 1
        %s2042 = smul.addr %s2041, 32
        %s2043 = scalar_lea.vmem [#allocation6], %s2042
        // Predicated region
        $region49: #{tpu_custom_call.1} parent=39 // pred_check
          %p2044 = pneg %p172
        $region50: #{tpu_custom_call.1} parent=39 // pred_check_branch
          %2046 = sbr.rel (%p2044) target = $region52
        $region51: #{tpu_custom_call.1} parent=39 // pred_region
          %s2047 = smul.u32 2, %s24
          %s2048 = smul.u32 2, %s25
          %s2050 = ssub.s32 512, 512
          %2051 = vsyncadd %s2040, %s2050
          %s2052 = smul.addr %s2047, 2
          %s2053 = sadd.s32 %s2048, %s2052
          %s2054 = smul.addr %s2053, 128
          %s2055 = scalar_lea.hbm %s5, %s2054
          %s2056 = sshll.u32 %s2043, 4
          %s2057 = int_to_ptr.vmem [resolvable:$true] %s2056
          %2062 = dma.vmem_to_hbm [thread:$0]  %s2057, 512, %s2055, %s2040, 256, 256, 16
        $region52: #{tpu_custom_call.1} parent=39 // pred_fallthru
          _
      $region40: #{tpu_custom_call.1} parent=5 // pred_fallthru
        _
      %p2063 = scmp.le.s32.totalorder 2, %s15
      // Predicated region
      $region53: #{tpu_custom_call.1} parent=5 // pred_check
        %p2064 = pneg %p2063
      $region54: #{tpu_custom_call.1} parent=5 // pred_check_branch
        %2066 = sbr.rel (%p2064) target = $region56
      $region55: #{tpu_custom_call.1} parent=5 // pred_region
        %s2067 = ssub.s32 %s15, 2
        // Predicated region
        $region57: #{tpu_custom_call.1} parent=55 // pred_check
          %p2068 = pneg %p178
        $region58: #{tpu_custom_call.1} parent=55 // pred_check_branch
          %2070 = sbr.rel (%p2068) target = $region60
        $region59: #{tpu_custom_call.1} parent=55 // pred_region
          %s2071 = sand.u32 %s163, 1
          %s2072 = scalar_lea.sflag [#allocation5], %s2071
          %s2073 = sand.u32 %s163, 1
          %s2074 = smul.addr %s2073, 32
          %s2075 = scalar_lea.vmem [#allocation6], %s2074
          %2076 = dma.done %s2072, 512
        $region60: #{tpu_custom_call.1} parent=55 // pred_fallthru
          _
      $region56: #{tpu_custom_call.1} parent=5 // pred_fallthru
        _
    $region6: #{tpu_custom_call.1} parent=1 // loop_footer
      %s19 = sadd.s32 1, %s15
    $region7: #{tpu_custom_call.1} parent=1 // loop_footer_branch
      %14 = sbr.rel target = $region3
    $region8: #{tpu_custom_call.1} parent=1 // loop_exit
      _
    %2077 = vsyncpa [#allocation4], 1
    %s2078 = scalar_lea.sflag [#allocation4], 1
    %2079 = vsyncpa %s2078, 1
    %2080 = vsyncpa [#allocation5], 1
    %s2081 = scalar_lea.sflag [#allocation5], 1
    %2082 = vsyncpa %s2081, 1

</llo_original>
